<compile_context>
chip_gen: v7x
topology: tpu7x:2x2x1
jax: 0.10.0
libtpu: 0.0.40
codegen_flags: <defaults>
</compile_context>

<pallas_src>
import jax
import jax.numpy as jnp
from jax.experimental import pallas as pl
from jax.experimental.pallas import tpu as pltpu


# ----------------------------------------------------------------------------
# Fused Pallas kernel: num_layers GRU layers + Linear -> ReLU -> Linear head
# ----------------------------------------------------------------------------
def make_fused_kernel(T, B, H, num_layers):
    def kernel(*args):
        # args = x, (wi, wh, bi, bh) * num_layers, w1, b1, w2_row, b2, out
        x_ref = args[0]
        layer_refs = [tuple(args[1 + 4 * i: 1 + 4 * (i + 1)]) for i in range(num_layers)]
        idx = 1 + 4 * num_layers
        w1_ref, b1_ref, w2_ref, b2_ref = args[idx: idx + 4]
        out_ref = args[idx + 4]

        h_seq = x_ref[...].astype(jnp.float32)            # [T*B, In]

        for (wi_ref, wh_ref, bi_ref, bh_ref) in layer_refs:
            # Hoisted, non-recurrent input projection: one big matmul.
            gi_all = (jnp.dot(h_seq, wi_ref[...],
                              preferred_element_type=jnp.float32)
                      + bi_ref[...])                      # [T*B, 3H]

            # Load recurrent weights/biases once; they stay register-resident.
            whp = wh_ref[...]                             # [H, 3H]
            bhp = bh_ref[...]                             # [1, 3H]

            h = jnp.zeros((B, H), jnp.float32)
            outs = []
            # Fully unrolled recurrence (T is small & static).
            for t in range(T):
                gi = gi_all[t * B:(t + 1) * B]            # [B, 3H] static slice
                gh = jnp.dot(h, whp,
                             preferred_element_type=jnp.float32) + bhp
                r = jax.nn.sigmoid(gi[:, 0:H] + gh[:, 0:H])
                z = jax.nn.sigmoid(gi[:, H:2 * H] + gh[:, H:2 * H])
                n = jnp.tanh(gi[:, 2 * H:3 * H] + r * gh[:, 2 * H:3 * H])
                h = (1.0 - z) * n + z * h
                outs.append(h)
            h_seq = jnp.concatenate(outs, axis=0)         # [T*B, H]
            # TODO(synk): nn.GRU inter-layer dropout is a no-op at inference; not applied.

        # Regressor head: Linear(H->H) -> ReLU -> Linear(H->1).
        hidden = jnp.maximum(
            jnp.dot(h_seq, w1_ref[...],
                    preferred_element_type=jnp.float32) + b1_ref[...],
            0.0)                                          # [T*B, H]
        # H->1 projection on the VPU/XLU (avoid a 1-lane MXU matmul).
        y = jnp.sum(hidden * w2_ref[...], axis=-1, keepdims=True) + b2_ref[...]  # [T*B, 1]
        # Lane-dense store: broadcast across 128 lanes; wrapper slices lane 0.
        out_ref[...] = jnp.broadcast_to(y, out_ref.shape).astype(out_ref.dtype)

    return kernel


# ----------------------------------------------------------------------------
# Glue: Time2Vec, embedding lookup, weight repacking, single pallas_call
# ----------------------------------------------------------------------------
def time2vec(t, w0, b0, W, Bv):
    # Standard Time2Vec: [w0*t + b0, sin(t*W + B)] -> last dim = k+1
    v0 = (w0 * t + b0)[..., None]
    v = jnp.sin(t[..., None] * W[None, None, :] + Bv[None, None, :])
    return jnp.concatenate([v0, v], axis=-1)


def gru_regressor_forward(params, event_activities, event_times):
    # event_activities: [T, B] int32, event_times: [T, B] f32
    T, B = event_activities.shape
    H = params["emb"].shape[1]
    num_layers = len(params["gru_layers"])

    act_emb = params["emb"][event_activities]                 # [T, B, H]
    t_emb = time2vec(event_times, params["t2v_w0"], params["t2v_b0"],
                     params["t2v_W"], params["t2v_B"])        # [T, B, k+1]
    x = jnp.concatenate([t_emb, act_emb], axis=-1)            # [T, B, H+k+1]
    x_flat = x.reshape(T * B, -1).astype(jnp.float32)

    # Repack from PyTorch layout: weight_ih_l{k} is [3H, In] with r|z|n row
    # blocks -> transpose to [In, 3H] (columns keep r|z|n order).
    kernel_inputs = [x_flat]
    for (W_ih, W_hh, b_ih, b_hh) in params["gru_layers"]:
        kernel_inputs += [W_ih.T, W_hh.T,
                          b_ih.reshape(1, -1), b_hh.reshape(1, -1)]
    kernel_inputs += [params["w1"].T, params["b1"].reshape(1, -1),
                      params["w2"].reshape(1, -1), params["b2"].reshape(1, 1)]

    out = pl.pallas_call(
        make_fused_kernel(T, B, H, num_layers),
        out_shape=jax.ShapeDtypeStruct((T * B, 128), jnp.float32),
        in_specs=[pl.BlockSpec(memory_space=pltpu.MemorySpace.VMEM)]
                 * len(kernel_inputs),
        out_specs=pl.BlockSpec(memory_space=pltpu.MemorySpace.VMEM),
    )(*kernel_inputs)

    return out[:, 0].reshape(T, B)                            # squeeze(-1)


# ----------------------------------------------------------------------------
# Pure-JAX reference (uses PyTorch-layout weights directly)
# ----------------------------------------------------------------------------
def forward_ref(params, event_activities, event_times):
    T, B = event_activities.shape
    H = params["emb"].shape[1]
    act_emb = params["emb"][event_activities]
    t_emb = time2vec(event_times, params["t2v_w0"], params["t2v_b0"],
                     params["t2v_W"], params["t2v_B"])
    h_seq = jnp.concatenate([t_emb, act_emb], axis=-1)
    for (W_ih, W_hh, b_ih, b_hh) in params["gru_layers"]:
        h = jnp.zeros((B, H), jnp.float32)
        outs = []
        for t in range(T):
            gi = h_seq[t] @ W_ih.T + b_ih
            gh = h @ W_hh.T + b_hh
            r = jax.nn.sigmoid(gi[:, :H] + gh[:, :H])
            z = jax.nn.sigmoid(gi[:, H:2 * H] + gh[:, H:2 * H])
            n = jnp.tanh(gi[:, 2 * H:] + r * gh[:, 2 * H:])
            h = (1.0 - z) * n + z * h
            outs.append(h)
        h_seq = jnp.stack(outs)
    flat = h_seq.reshape(T * B, H)
    y = (jnp.maximum(flat @ params["w1"].T + params["b1"], 0.0)
         @ params["w2"].T + params["b2"])
    return y.reshape(T, B)


# ----------------------------------------------------------------------------
# Main
# ----------------------------------------------------------------------------
if __name__ == "__main__":
    num_activities = 10
    hidden = 32
    num_gru_layers = 2
    time2vec_k = 7          # -> time features = k + 1 = 8
    T, B = 8, 4

    key = jax.random.PRNGKey(0)
    keys = iter(jax.random.split(key, 64))

    # inputs
    event_activities = jax.random.randint(next(keys), (T, B), 0,
                                          num_activities, jnp.int32)
    event_times = jax.random.uniform(next(keys), (T, B), jnp.float32)

    # parameters (PyTorch-style layouts and init scales)
    s = 1.0 / jnp.sqrt(hidden)
    params = {}
    params["emb"] = jax.random.normal(next(keys), (num_activities, hidden), jnp.float32)
    params["t2v_w0"] = jax.random.normal(next(keys), (), jnp.float32)
    params["t2v_b0"] = jax.random.normal(next(keys), (), jnp.float32)
    params["t2v_W"] = jax.random.normal(next(keys), (time2vec_k,), jnp.float32)
    params["t2v_B"] = jax.random.normal(next(keys), (time2vec_k,), jnp.float32)

    gru_layers = []
    for layer in range(num_gru_layers):
        in_size = hidden + time2vec_k + 1 if layer == 0 else hidden
        W_ih = jax.random.uniform(next(keys), (3 * hidden, in_size), jnp.float32, -s, s)
        W_hh = jax.random.uniform(next(keys), (3 * hidden, hidden), jnp.float32, -s, s)
        b_ih = jax.random.uniform(next(keys), (3 * hidden,), jnp.float32, -s, s)
        b_hh = jax.random.uniform(next(keys), (3 * hidden,), jnp.float32, -s, s)
        gru_layers.append((W_ih, W_hh, b_ih, b_hh))
    params["gru_layers"] = gru_layers

    params["w1"] = jax.random.uniform(next(keys), (hidden, hidden), jnp.float32, -s, s)
    params["b1"] = jax.random.uniform(next(keys), (hidden,), jnp.float32, -s, s)
    params["w2"] = jax.random.uniform(next(keys), (1, hidden), jnp.float32, -s, s)
    params["b2"] = jax.random.uniform(next(keys), (1,), jnp.float32, -s, s)

    fwd = jax.jit(gru_regressor_forward)
    out = fwd(params, event_activities, event_times)
    out = jax.block_until_ready(out)

    ref = forward_ref(params, event_activities, event_times)
    assert out.shape == (T, B), out.shape
    assert jnp.allclose(out, ref, atol=1e-4, rtol=1e-4), \
        float(jnp.max(jnp.abs(out - ref)))

    print("KERNEL_OK")
</pallas_src>

<mosaic_0001>
module attributes {stable_mosaic.version = 11 : i64} {
  func.func @kernel(%arg0: memref<32x40xf32, #tpu.memory_space<vmem>>, %arg1: memref<40x96xf32, #tpu.memory_space<vmem>>, %arg2: memref<32x96xf32, #tpu.memory_space<vmem>>, %arg3: memref<1x96xf32, #tpu.memory_space<vmem>>, %arg4: memref<1x96xf32, #tpu.memory_space<vmem>>, %arg5: memref<32x96xf32, #tpu.memory_space<vmem>>, %arg6: memref<32x96xf32, #tpu.memory_space<vmem>>, %arg7: memref<1x96xf32, #tpu.memory_space<vmem>>, %arg8: memref<1x96xf32, #tpu.memory_space<vmem>>, %arg9: memref<32x32xf32, #tpu.memory_space<vmem>>, %arg10: memref<1x32xf32, #tpu.memory_space<vmem>>, %arg11: memref<1x32xf32, #tpu.memory_space<vmem>>, %arg12: memref<1x1xf32, #tpu.memory_space<vmem>>, %arg13: memref<32x128xf32, #tpu.memory_space<vmem>>) attributes {dimension_semantics = [], scalar_prefetch = 0 : i64, scratch_operands = 0 : i64, tpu.core_type = #tpu.core_type<tc>} {
    %c0 = arith.constant 0 : index
    %c0_0 = arith.constant 0 : index
    %0 = vector.load %arg0[%c0, %c0_0] : memref<32x40xf32, #tpu.memory_space<vmem>>, vector<32x40xf32>
    %c0_1 = arith.constant 0 : index
    %c0_2 = arith.constant 0 : index
    %1 = vector.load %arg1[%c0_1, %c0_2] : memref<40x96xf32, #tpu.memory_space<vmem>>, vector<40x96xf32>
    %cst = arith.constant dense<0.000000e+00> : vector<32x96xf32>
    %2 = tpu.matmul %0, %1, %cst {dimension_numbers = #tpu.dot_dimension_numbers<[1], [0], [0], [1], [0, 0, 1, 1], [], []>} : vector<32x40xf32>, vector<40x96xf32>, vector<32x96xf32> -> vector<32x96xf32>
    %c0_3 = arith.constant 0 : index
    %c0_4 = arith.constant 0 : index
    %3 = vector.load %arg3[%c0_3, %c0_4] : memref<1x96xf32, #tpu.memory_space<vmem>>, vector<1x96xf32>
    %4 = vector.broadcast %3 : vector<1x96xf32> to vector<32x96xf32>
    %5 = arith.addf %2, %4 : vector<32x96xf32>
    %c0_5 = arith.constant 0 : index
    %c0_6 = arith.constant 0 : index
    %6 = vector.load %arg2[%c0_5, %c0_6] : memref<32x96xf32, #tpu.memory_space<vmem>>, vector<32x96xf32>
    %c0_7 = arith.constant 0 : index
    %c0_8 = arith.constant 0 : index
    %7 = vector.load %arg4[%c0_7, %c0_8] : memref<1x96xf32, #tpu.memory_space<vmem>>, vector<1x96xf32>
    %cst_9 = arith.constant 0.000000e+00 : f32
    %8 = vector.broadcast %cst_9 : f32 to vector<4x32xf32>
    %9 = vector.extract_strided_slice %5 {offsets = [0, 0], sizes = [4, 96], strides = [1, 1]} : vector<32x96xf32> to vector<4x96xf32>
    %cst_10 = arith.constant dense<0.000000e+00> : vector<4x96xf32>
    %10 = tpu.matmul %8, %6, %cst_10 {dimension_numbers = #tpu.dot_dimension_numbers<[1], [0], [0], [1], [0, 0, 1, 1], [], []>} : vector<4x32xf32>, vector<32x96xf32>, vector<4x96xf32> -> vector<4x96xf32>
    %11 = vector.broadcast %7 : vector<1x96xf32> to vector<4x96xf32>
    %12 = arith.addf %10, %11 : vector<4x96xf32>
    %13 = vector.extract_strided_slice %9 {offsets = [0, 0], sizes = [4, 32], strides = [1, 1]} : vector<4x96xf32> to vector<4x32xf32>
    %14 = vector.extract_strided_slice %12 {offsets = [0, 0], sizes = [4, 32], strides = [1, 1]} : vector<4x96xf32> to vector<4x32xf32>
    %15 = arith.addf %13, %14 : vector<4x32xf32>
    %16 = arith.negf %15 : vector<4x32xf32>
    %17 = math.exp %16 : vector<4x32xf32>
    %cst_11 = arith.constant 1.000000e+00 : f32
    %18 = vector.broadcast %cst_11 : f32 to vector<4x32xf32>
    %19 = arith.addf %18, %17 : vector<4x32xf32>
    %20 = arith.divf %18, %19 : vector<4x32xf32>
    %21 = vector.extract_strided_slice %9 {offsets = [0, 32], sizes = [4, 32], strides = [1, 1]} : vector<4x96xf32> to vector<4x32xf32>
    %22 = vector.extract_strided_slice %12 {offsets = [0, 32], sizes = [4, 32], strides = [1, 1]} : vector<4x96xf32> to vector<4x32xf32>
    %23 = arith.addf %21, %22 : vector<4x32xf32>
    %24 = arith.negf %23 : vector<4x32xf32>
    %25 = math.exp %24 : vector<4x32xf32>
    %cst_12 = arith.constant 1.000000e+00 : f32
    %26 = vector.broadcast %cst_12 : f32 to vector<4x32xf32>
    %27 = arith.addf %26, %25 : vector<4x32xf32>
    %28 = arith.divf %26, %27 : vector<4x32xf32>
    %29 = vector.extract_strided_slice %9 {offsets = [0, 64], sizes = [4, 32], strides = [1, 1]} : vector<4x96xf32> to vector<4x32xf32>
    %30 = vector.extract_strided_slice %12 {offsets = [0, 64], sizes = [4, 32], strides = [1, 1]} : vector<4x96xf32> to vector<4x32xf32>
    %31 = arith.mulf %20, %30 : vector<4x32xf32>
    %32 = arith.addf %29, %31 : vector<4x32xf32>
    %33 = math.tanh %32 : vector<4x32xf32>
    %cst_13 = arith.constant 1.000000e+00 : f32
    %34 = vector.broadcast %cst_13 : f32 to vector<4x32xf32>
    %35 = arith.subf %34, %28 : vector<4x32xf32>
    %36 = arith.mulf %35, %33 : vector<4x32xf32>
    %37 = arith.mulf %28, %8 : vector<4x32xf32>
    %38 = arith.addf %36, %37 : vector<4x32xf32>
    %39 = vector.extract_strided_slice %5 {offsets = [4, 0], sizes = [4, 96], strides = [1, 1]} : vector<32x96xf32> to vector<4x96xf32>
    %cst_14 = arith.constant dense<0.000000e+00> : vector<4x96xf32>
    %40 = tpu.matmul %38, %6, %cst_14 {dimension_numbers = #tpu.dot_dimension_numbers<[1], [0], [0], [1], [0, 0, 1, 1], [], []>} : vector<4x32xf32>, vector<32x96xf32>, vector<4x96xf32> -> vector<4x96xf32>
    %41 = vector.broadcast %7 : vector<1x96xf32> to vector<4x96xf32>
    %42 = arith.addf %40, %41 : vector<4x96xf32>
    %43 = vector.extract_strided_slice %39 {offsets = [0, 0], sizes = [4, 32], strides = [1, 1]} : vector<4x96xf32> to vector<4x32xf32>
    %44 = vector.extract_strided_slice %42 {offsets = [0, 0], sizes = [4, 32], strides = [1, 1]} : vector<4x96xf32> to vector<4x32xf32>
    %45 = arith.addf %43, %44 : vector<4x32xf32>
    %46 = arith.negf %45 : vector<4x32xf32>
    %47 = math.exp %46 : vector<4x32xf32>
    %cst_15 = arith.constant 1.000000e+00 : f32
    %48 = vector.broadcast %cst_15 : f32 to vector<4x32xf32>
    %49 = arith.addf %48, %47 : vector<4x32xf32>
    %50 = arith.divf %48, %49 : vector<4x32xf32>
    %51 = vector.extract_strided_slice %39 {offsets = [0, 32], sizes = [4, 32], strides = [1, 1]} : vector<4x96xf32> to vector<4x32xf32>
    %52 = vector.extract_strided_slice %42 {offsets = [0, 32], sizes = [4, 32], strides = [1, 1]} : vector<4x96xf32> to vector<4x32xf32>
    %53 = arith.addf %51, %52 : vector<4x32xf32>
    %54 = arith.negf %53 : vector<4x32xf32>
    %55 = math.exp %54 : vector<4x32xf32>
    %cst_16 = arith.constant 1.000000e+00 : f32
    %56 = vector.broadcast %cst_16 : f32 to vector<4x32xf32>
    %57 = arith.addf %56, %55 : vector<4x32xf32>
    %58 = arith.divf %56, %57 : vector<4x32xf32>
    %59 = vector.extract_strided_slice %39 {offsets = [0, 64], sizes = [4, 32], strides = [1, 1]} : vector<4x96xf32> to vector<4x32xf32>
    %60 = vector.extract_strided_slice %42 {offsets = [0, 64], sizes = [4, 32], strides = [1, 1]} : vector<4x96xf32> to vector<4x32xf32>
    %61 = arith.mulf %50, %60 : vector<4x32xf32>
    %62 = arith.addf %59, %61 : vector<4x32xf32>
    %63 = math.tanh %62 : vector<4x32xf32>
    %cst_17 = arith.constant 1.000000e+00 : f32
    %64 = vector.broadcast %cst_17 : f32 to vector<4x32xf32>
    %65 = arith.subf %64, %58 : vector<4x32xf32>
    %66 = arith.mulf %65, %63 : vector<4x32xf32>
    %67 = arith.mulf %58, %38 : vector<4x32xf32>
    %68 = arith.addf %66, %67 : vector<4x32xf32>
    %69 = vector.extract_strided_slice %5 {offsets = [8, 0], sizes = [4, 96], strides = [1, 1]} : vector<32x96xf32> to vector<4x96xf32>
    %cst_18 = arith.constant dense<0.000000e+00> : vector<4x96xf32>
    %70 = tpu.matmul %68, %6, %cst_18 {dimension_numbers = #tpu.dot_dimension_numbers<[1], [0], [0], [1], [0, 0, 1, 1], [], []>} : vector<4x32xf32>, vector<32x96xf32>, vector<4x96xf32> -> vector<4x96xf32>
    %71 = vector.broadcast %7 : vector<1x96xf32> to vector<4x96xf32>
    %72 = arith.addf %70, %71 : vector<4x96xf32>
    %73 = vector.extract_strided_slice %69 {offsets = [0, 0], sizes = [4, 32], strides = [1, 1]} : vector<4x96xf32> to vector<4x32xf32>
    %74 = vector.extract_strided_slice %72 {offsets = [0, 0], sizes = [4, 32], strides = [1, 1]} : vector<4x96xf32> to vector<4x32xf32>
    %75 = arith.addf %73, %74 : vector<4x32xf32>
    %76 = arith.negf %75 : vector<4x32xf32>
    %77 = math.exp %76 : vector<4x32xf32>
    %cst_19 = arith.constant 1.000000e+00 : f32
    %78 = vector.broadcast %cst_19 : f32 to vector<4x32xf32>
    %79 = arith.addf %78, %77 : vector<4x32xf32>
    %80 = arith.divf %78, %79 : vector<4x32xf32>
    %81 = vector.extract_strided_slice %69 {offsets = [0, 32], sizes = [4, 32], strides = [1, 1]} : vector<4x96xf32> to vector<4x32xf32>
    %82 = vector.extract_strided_slice %72 {offsets = [0, 32], sizes = [4, 32], strides = [1, 1]} : vector<4x96xf32> to vector<4x32xf32>
    %83 = arith.addf %81, %82 : vector<4x32xf32>
    %84 = arith.negf %83 : vector<4x32xf32>
    %85 = math.exp %84 : vector<4x32xf32>
    %cst_20 = arith.constant 1.000000e+00 : f32
    %86 = vector.broadcast %cst_20 : f32 to vector<4x32xf32>
    %87 = arith.addf %86, %85 : vector<4x32xf32>
    %88 = arith.divf %86, %87 : vector<4x32xf32>
    %89 = vector.extract_strided_slice %69 {offsets = [0, 64], sizes = [4, 32], strides = [1, 1]} : vector<4x96xf32> to vector<4x32xf32>
    %90 = vector.extract_strided_slice %72 {offsets = [0, 64], sizes = [4, 32], strides = [1, 1]} : vector<4x96xf32> to vector<4x32xf32>
    %91 = arith.mulf %80, %90 : vector<4x32xf32>
    %92 = arith.addf %89, %91 : vector<4x32xf32>
    %93 = math.tanh %92 : vector<4x32xf32>
    %cst_21 = arith.constant 1.000000e+00 : f32
    %94 = vector.broadcast %cst_21 : f32 to vector<4x32xf32>
    %95 = arith.subf %94, %88 : vector<4x32xf32>
    %96 = arith.mulf %95, %93 : vector<4x32xf32>
    %97 = arith.mulf %88, %68 : vector<4x32xf32>
    %98 = arith.addf %96, %97 : vector<4x32xf32>
    %99 = vector.extract_strided_slice %5 {offsets = [12, 0], sizes = [4, 96], strides = [1, 1]} : vector<32x96xf32> to vector<4x96xf32>
    %cst_22 = arith.constant dense<0.000000e+00> : vector<4x96xf32>
    %100 = tpu.matmul %98, %6, %cst_22 {dimension_numbers = #tpu.dot_dimension_numbers<[1], [0], [0], [1], [0, 0, 1, 1], [], []>} : vector<4x32xf32>, vector<32x96xf32>, vector<4x96xf32> -> vector<4x96xf32>
    %101 = vector.broadcast %7 : vector<1x96xf32> to vector<4x96xf32>
    %102 = arith.addf %100, %101 : vector<4x96xf32>
    %103 = vector.extract_strided_slice %99 {offsets = [0, 0], sizes = [4, 32], strides = [1, 1]} : vector<4x96xf32> to vector<4x32xf32>
    %104 = vector.extract_strided_slice %102 {offsets = [0, 0], sizes = [4, 32], strides = [1, 1]} : vector<4x96xf32> to vector<4x32xf32>
    %105 = arith.addf %103, %104 : vector<4x32xf32>
    %106 = arith.negf %105 : vector<4x32xf32>
    %107 = math.exp %106 : vector<4x32xf32>
    %cst_23 = arith.constant 1.000000e+00 : f32
    %108 = vector.broadcast %cst_23 : f32 to vector<4x32xf32>
    %109 = arith.addf %108, %107 : vector<4x32xf32>
    %110 = arith.divf %108, %109 : vector<4x32xf32>
    %111 = vector.extract_strided_slice %99 {offsets = [0, 32], sizes = [4, 32], strides = [1, 1]} : vector<4x96xf32> to vector<4x32xf32>
    %112 = vector.extract_strided_slice %102 {offsets = [0, 32], sizes = [4, 32], strides = [1, 1]} : vector<4x96xf32> to vector<4x32xf32>
    %113 = arith.addf %111, %112 : vector<4x32xf32>
    %114 = arith.negf %113 : vector<4x32xf32>
    %115 = math.exp %114 : vector<4x32xf32>
    %cst_24 = arith.constant 1.000000e+00 : f32
    %116 = vector.broadcast %cst_24 : f32 to vector<4x32xf32>
    %117 = arith.addf %116, %115 : vector<4x32xf32>
    %118 = arith.divf %116, %117 : vector<4x32xf32>
    %119 = vector.extract_strided_slice %99 {offsets = [0, 64], sizes = [4, 32], strides = [1, 1]} : vector<4x96xf32> to vector<4x32xf32>
    %120 = vector.extract_strided_slice %102 {offsets = [0, 64], sizes = [4, 32], strides = [1, 1]} : vector<4x96xf32> to vector<4x32xf32>
    %121 = arith.mulf %110, %120 : vector<4x32xf32>
    %122 = arith.addf %119, %121 : vector<4x32xf32>
    %123 = math.tanh %122 : vector<4x32xf32>
    %cst_25 = arith.constant 1.000000e+00 : f32
    %124 = vector.broadcast %cst_25 : f32 to vector<4x32xf32>
    %125 = arith.subf %124, %118 : vector<4x32xf32>
    %126 = arith.mulf %125, %123 : vector<4x32xf32>
    %127 = arith.mulf %118, %98 : vector<4x32xf32>
    %128 = arith.addf %126, %127 : vector<4x32xf32>
    %129 = vector.extract_strided_slice %5 {offsets = [16, 0], sizes = [4, 96], strides = [1, 1]} : vector<32x96xf32> to vector<4x96xf32>
    %cst_26 = arith.constant dense<0.000000e+00> : vector<4x96xf32>
    %130 = tpu.matmul %128, %6, %cst_26 {dimension_numbers = #tpu.dot_dimension_numbers<[1], [0], [0], [1], [0, 0, 1, 1], [], []>} : vector<4x32xf32>, vector<32x96xf32>, vector<4x96xf32> -> vector<4x96xf32>
    %131 = vector.broadcast %7 : vector<1x96xf32> to vector<4x96xf32>
    %132 = arith.addf %130, %131 : vector<4x96xf32>
    %133 = vector.extract_strided_slice %129 {offsets = [0, 0], sizes = [4, 32], strides = [1, 1]} : vector<4x96xf32> to vector<4x32xf32>
    %134 = vector.extract_strided_slice %132 {offsets = [0, 0], sizes = [4, 32], strides = [1, 1]} : vector<4x96xf32> to vector<4x32xf32>
    %135 = arith.addf %133, %134 : vector<4x32xf32>
    %136 = arith.negf %135 : vector<4x32xf32>
    %137 = math.exp %136 : vector<4x32xf32>
    %cst_27 = arith.constant 1.000000e+00 : f32
    %138 = vector.broadcast %cst_27 : f32 to vector<4x32xf32>
    %139 = arith.addf %138, %137 : vector<4x32xf32>
    %140 = arith.divf %138, %139 : vector<4x32xf32>
    %141 = vector.extract_strided_slice %129 {offsets = [0, 32], sizes = [4, 32], strides = [1, 1]} : vector<4x96xf32> to vector<4x32xf32>
    %142 = vector.extract_strided_slice %132 {offsets = [0, 32], sizes = [4, 32], strides = [1, 1]} : vector<4x96xf32> to vector<4x32xf32>
    %143 = arith.addf %141, %142 : vector<4x32xf32>
    %144 = arith.negf %143 : vector<4x32xf32>
    %145 = math.exp %144 : vector<4x32xf32>
    %cst_28 = arith.constant 1.000000e+00 : f32
    %146 = vector.broadcast %cst_28 : f32 to vector<4x32xf32>
    %147 = arith.addf %146, %145 : vector<4x32xf32>
    %148 = arith.divf %146, %147 : vector<4x32xf32>
    %149 = vector.extract_strided_slice %129 {offsets = [0, 64], sizes = [4, 32], strides = [1, 1]} : vector<4x96xf32> to vector<4x32xf32>
    %150 = vector.extract_strided_slice %132 {offsets = [0, 64], sizes = [4, 32], strides = [1, 1]} : vector<4x96xf32> to vector<4x32xf32>
    %151 = arith.mulf %140, %150 : vector<4x32xf32>
    %152 = arith.addf %149, %151 : vector<4x32xf32>
    %153 = math.tanh %152 : vector<4x32xf32>
    %cst_29 = arith.constant 1.000000e+00 : f32
    %154 = vector.broadcast %cst_29 : f32 to vector<4x32xf32>
    %155 = arith.subf %154, %148 : vector<4x32xf32>
    %156 = arith.mulf %155, %153 : vector<4x32xf32>
    %157 = arith.mulf %148, %128 : vector<4x32xf32>
    %158 = arith.addf %156, %157 : vector<4x32xf32>
    %159 = vector.extract_strided_slice %5 {offsets = [20, 0], sizes = [4, 96], strides = [1, 1]} : vector<32x96xf32> to vector<4x96xf32>
    %cst_30 = arith.constant dense<0.000000e+00> : vector<4x96xf32>
    %160 = tpu.matmul %158, %6, %cst_30 {dimension_numbers = #tpu.dot_dimension_numbers<[1], [0], [0], [1], [0, 0, 1, 1], [], []>} : vector<4x32xf32>, vector<32x96xf32>, vector<4x96xf32> -> vector<4x96xf32>
    %161 = vector.broadcast %7 : vector<1x96xf32> to vector<4x96xf32>
    %162 = arith.addf %160, %161 : vector<4x96xf32>
    %163 = vector.extract_strided_slice %159 {offsets = [0, 0], sizes = [4, 32], strides = [1, 1]} : vector<4x96xf32> to vector<4x32xf32>
    %164 = vector.extract_strided_slice %162 {offsets = [0, 0], sizes = [4, 32], strides = [1, 1]} : vector<4x96xf32> to vector<4x32xf32>
    %165 = arith.addf %163, %164 : vector<4x32xf32>
    %166 = arith.negf %165 : vector<4x32xf32>
    %167 = math.exp %166 : vector<4x32xf32>
    %cst_31 = arith.constant 1.000000e+00 : f32
    %168 = vector.broadcast %cst_31 : f32 to vector<4x32xf32>
    %169 = arith.addf %168, %167 : vector<4x32xf32>
    %170 = arith.divf %168, %169 : vector<4x32xf32>
    %171 = vector.extract_strided_slice %159 {offsets = [0, 32], sizes = [4, 32], strides = [1, 1]} : vector<4x96xf32> to vector<4x32xf32>
    %172 = vector.extract_strided_slice %162 {offsets = [0, 32], sizes = [4, 32], strides = [1, 1]} : vector<4x96xf32> to vector<4x32xf32>
    %173 = arith.addf %171, %172 : vector<4x32xf32>
    %174 = arith.negf %173 : vector<4x32xf32>
    %175 = math.exp %174 : vector<4x32xf32>
    %cst_32 = arith.constant 1.000000e+00 : f32
    %176 = vector.broadcast %cst_32 : f32 to vector<4x32xf32>
    %177 = arith.addf %176, %175 : vector<4x32xf32>
    %178 = arith.divf %176, %177 : vector<4x32xf32>
    %179 = vector.extract_strided_slice %159 {offsets = [0, 64], sizes = [4, 32], strides = [1, 1]} : vector<4x96xf32> to vector<4x32xf32>
    %180 = vector.extract_strided_slice %162 {offsets = [0, 64], sizes = [4, 32], strides = [1, 1]} : vector<4x96xf32> to vector<4x32xf32>
    %181 = arith.mulf %170, %180 : vector<4x32xf32>
    %182 = arith.addf %179, %181 : vector<4x32xf32>
    %183 = math.tanh %182 : vector<4x32xf32>
    %cst_33 = arith.constant 1.000000e+00 : f32
    %184 = vector.broadcast %cst_33 : f32 to vector<4x32xf32>
    %185 = arith.subf %184, %178 : vector<4x32xf32>
    %186 = arith.mulf %185, %183 : vector<4x32xf32>
    %187 = arith.mulf %178, %158 : vector<4x32xf32>
    %188 = arith.addf %186, %187 : vector<4x32xf32>
    %189 = vector.extract_strided_slice %5 {offsets = [24, 0], sizes = [4, 96], strides = [1, 1]} : vector<32x96xf32> to vector<4x96xf32>
    %cst_34 = arith.constant dense<0.000000e+00> : vector<4x96xf32>
    %190 = tpu.matmul %188, %6, %cst_34 {dimension_numbers = #tpu.dot_dimension_numbers<[1], [0], [0], [1], [0, 0, 1, 1], [], []>} : vector<4x32xf32>, vector<32x96xf32>, vector<4x96xf32> -> vector<4x96xf32>
    %191 = vector.broadcast %7 : vector<1x96xf32> to vector<4x96xf32>
    %192 = arith.addf %190, %191 : vector<4x96xf32>
    %193 = vector.extract_strided_slice %189 {offsets = [0, 0], sizes = [4, 32], strides = [1, 1]} : vector<4x96xf32> to vector<4x32xf32>
    %194 = vector.extract_strided_slice %192 {offsets = [0, 0], sizes = [4, 32], strides = [1, 1]} : vector<4x96xf32> to vector<4x32xf32>
    %195 = arith.addf %193, %194 : vector<4x32xf32>
    %196 = arith.negf %195 : vector<4x32xf32>
    %197 = math.exp %196 : vector<4x32xf32>
    %cst_35 = arith.constant 1.000000e+00 : f32
    %198 = vector.broadcast %cst_35 : f32 to vector<4x32xf32>
    %199 = arith.addf %198, %197 : vector<4x32xf32>
    %200 = arith.divf %198, %199 : vector<4x32xf32>
    %201 = vector.extract_strided_slice %189 {offsets = [0, 32], sizes = [4, 32], strides = [1, 1]} : vector<4x96xf32> to vector<4x32xf32>
    %202 = vector.extract_strided_slice %192 {offsets = [0, 32], sizes = [4, 32], strides = [1, 1]} : vector<4x96xf32> to vector<4x32xf32>
    %203 = arith.addf %201, %202 : vector<4x32xf32>
    %204 = arith.negf %203 : vector<4x32xf32>
    %205 = math.exp %204 : vector<4x32xf32>
    %cst_36 = arith.constant 1.000000e+00 : f32
    %206 = vector.broadcast %cst_36 : f32 to vector<4x32xf32>
    %207 = arith.addf %206, %205 : vector<4x32xf32>
    %208 = arith.divf %206, %207 : vector<4x32xf32>
    %209 = vector.extract_strided_slice %189 {offsets = [0, 64], sizes = [4, 32], strides = [1, 1]} : vector<4x96xf32> to vector<4x32xf32>
    %210 = vector.extract_strided_slice %192 {offsets = [0, 64], sizes = [4, 32], strides = [1, 1]} : vector<4x96xf32> to vector<4x32xf32>
    %211 = arith.mulf %200, %210 : vector<4x32xf32>
    %212 = arith.addf %209, %211 : vector<4x32xf32>
    %213 = math.tanh %212 : vector<4x32xf32>
    %cst_37 = arith.constant 1.000000e+00 : f32
    %214 = vector.broadcast %cst_37 : f32 to vector<4x32xf32>
    %215 = arith.subf %214, %208 : vector<4x32xf32>
    %216 = arith.mulf %215, %213 : vector<4x32xf32>
    %217 = arith.mulf %208, %188 : vector<4x32xf32>
    %218 = arith.addf %216, %217 : vector<4x32xf32>
    %219 = vector.extract_strided_slice %5 {offsets = [28, 0], sizes = [4, 96], strides = [1, 1]} : vector<32x96xf32> to vector<4x96xf32>
    %cst_38 = arith.constant dense<0.000000e+00> : vector<4x96xf32>
    %220 = tpu.matmul %218, %6, %cst_38 {dimension_numbers = #tpu.dot_dimension_numbers<[1], [0], [0], [1], [0, 0, 1, 1], [], []>} : vector<4x32xf32>, vector<32x96xf32>, vector<4x96xf32> -> vector<4x96xf32>
    %221 = vector.broadcast %7 : vector<1x96xf32> to vector<4x96xf32>
    %222 = arith.addf %220, %221 : vector<4x96xf32>
    %223 = vector.extract_strided_slice %219 {offsets = [0, 0], sizes = [4, 32], strides = [1, 1]} : vector<4x96xf32> to vector<4x32xf32>
    %224 = vector.extract_strided_slice %222 {offsets = [0, 0], sizes = [4, 32], strides = [1, 1]} : vector<4x96xf32> to vector<4x32xf32>
    %225 = arith.addf %223, %224 : vector<4x32xf32>
    %226 = arith.negf %225 : vector<4x32xf32>
    %227 = math.exp %226 : vector<4x32xf32>
    %cst_39 = arith.constant 1.000000e+00 : f32
    %228 = vector.broadcast %cst_39 : f32 to vector<4x32xf32>
    %229 = arith.addf %228, %227 : vector<4x32xf32>
    %230 = arith.divf %228, %229 : vector<4x32xf32>
    %231 = vector.extract_strided_slice %219 {offsets = [0, 32], sizes = [4, 32], strides = [1, 1]} : vector<4x96xf32> to vector<4x32xf32>
    %232 = vector.extract_strided_slice %222 {offsets = [0, 32], sizes = [4, 32], strides = [1, 1]} : vector<4x96xf32> to vector<4x32xf32>
    %233 = arith.addf %231, %232 : vector<4x32xf32>
    %234 = arith.negf %233 : vector<4x32xf32>
    %235 = math.exp %234 : vector<4x32xf32>
    %cst_40 = arith.constant 1.000000e+00 : f32
    %236 = vector.broadcast %cst_40 : f32 to vector<4x32xf32>
    %237 = arith.addf %236, %235 : vector<4x32xf32>
    %238 = arith.divf %236, %237 : vector<4x32xf32>
    %239 = vector.extract_strided_slice %219 {offsets = [0, 64], sizes = [4, 32], strides = [1, 1]} : vector<4x96xf32> to vector<4x32xf32>
    %240 = vector.extract_strided_slice %222 {offsets = [0, 64], sizes = [4, 32], strides = [1, 1]} : vector<4x96xf32> to vector<4x32xf32>
    %241 = arith.mulf %230, %240 : vector<4x32xf32>
    %242 = arith.addf %239, %241 : vector<4x32xf32>
    %243 = math.tanh %242 : vector<4x32xf32>
    %cst_41 = arith.constant 1.000000e+00 : f32
    %244 = vector.broadcast %cst_41 : f32 to vector<4x32xf32>
    %245 = arith.subf %244, %238 : vector<4x32xf32>
    %246 = arith.mulf %245, %243 : vector<4x32xf32>
    %247 = arith.mulf %238, %218 : vector<4x32xf32>
    %248 = arith.addf %246, %247 : vector<4x32xf32>
    %249 = tpu.concatenate %38, %68, %98, %128, %158, %188, %218, %248 in 0 : vector<4x32xf32>, vector<4x32xf32>, vector<4x32xf32>, vector<4x32xf32>, vector<4x32xf32>, vector<4x32xf32>, vector<4x32xf32>, vector<4x32xf32> -> vector<32x32xf32>
    %c0_42 = arith.constant 0 : index
    %c0_43 = arith.constant 0 : index
    %250 = vector.load %arg5[%c0_42, %c0_43] : memref<32x96xf32, #tpu.memory_space<vmem>>, vector<32x96xf32>
    %cst_44 = arith.constant dense<0.000000e+00> : vector<32x96xf32>
    %251 = tpu.matmul %249, %250, %cst_44 {dimension_numbers = #tpu.dot_dimension_numbers<[1], [0], [0], [1], [0, 0, 1, 1], [], []>} : vector<32x32xf32>, vector<32x96xf32>, vector<32x96xf32> -> vector<32x96xf32>
    %c0_45 = arith.constant 0 : index
    %c0_46 = arith.constant 0 : index
    %252 = vector.load %arg7[%c0_45, %c0_46] : memref<1x96xf32, #tpu.memory_space<vmem>>, vector<1x96xf32>
    %253 = vector.broadcast %252 : vector<1x96xf32> to vector<32x96xf32>
    %254 = arith.addf %251, %253 : vector<32x96xf32>
    %c0_47 = arith.constant 0 : index
    %c0_48 = arith.constant 0 : index
    %255 = vector.load %arg6[%c0_47, %c0_48] : memref<32x96xf32, #tpu.memory_space<vmem>>, vector<32x96xf32>
    %c0_49 = arith.constant 0 : index
    %c0_50 = arith.constant 0 : index
    %256 = vector.load %arg8[%c0_49, %c0_50] : memref<1x96xf32, #tpu.memory_space<vmem>>, vector<1x96xf32>
    %cst_51 = arith.constant 0.000000e+00 : f32
    %257 = vector.broadcast %cst_51 : f32 to vector<4x32xf32>
    %258 = vector.extract_strided_slice %254 {offsets = [0, 0], sizes = [4, 96], strides = [1, 1]} : vector<32x96xf32> to vector<4x96xf32>
    %cst_52 = arith.constant dense<0.000000e+00> : vector<4x96xf32>
    %259 = tpu.matmul %257, %255, %cst_52 {dimension_numbers = #tpu.dot_dimension_numbers<[1], [0], [0], [1], [0, 0, 1, 1], [], []>} : vector<4x32xf32>, vector<32x96xf32>, vector<4x96xf32> -> vector<4x96xf32>
    %260 = vector.broadcast %256 : vector<1x96xf32> to vector<4x96xf32>
    %261 = arith.addf %259, %260 : vector<4x96xf32>
    %262 = vector.extract_strided_slice %258 {offsets = [0, 0], sizes = [4, 32], strides = [1, 1]} : vector<4x96xf32> to vector<4x32xf32>
    %263 = vector.extract_strided_slice %261 {offsets = [0, 0], sizes = [4, 32], strides = [1, 1]} : vector<4x96xf32> to vector<4x32xf32>
    %264 = arith.addf %262, %263 : vector<4x32xf32>
    %265 = arith.negf %264 : vector<4x32xf32>
    %266 = math.exp %265 : vector<4x32xf32>
    %cst_53 = arith.constant 1.000000e+00 : f32
    %267 = vector.broadcast %cst_53 : f32 to vector<4x32xf32>
    %268 = arith.addf %267, %266 : vector<4x32xf32>
    %269 = arith.divf %267, %268 : vector<4x32xf32>
    %270 = vector.extract_strided_slice %258 {offsets = [0, 32], sizes = [4, 32], strides = [1, 1]} : vector<4x96xf32> to vector<4x32xf32>
    %271 = vector.extract_strided_slice %261 {offsets = [0, 32], sizes = [4, 32], strides = [1, 1]} : vector<4x96xf32> to vector<4x32xf32>
    %272 = arith.addf %270, %271 : vector<4x32xf32>
    %273 = arith.negf %272 : vector<4x32xf32>
    %274 = math.exp %273 : vector<4x32xf32>
    %cst_54 = arith.constant 1.000000e+00 : f32
    %275 = vector.broadcast %cst_54 : f32 to vector<4x32xf32>
    %276 = arith.addf %275, %274 : vector<4x32xf32>
    %277 = arith.divf %275, %276 : vector<4x32xf32>
    %278 = vector.extract_strided_slice %258 {offsets = [0, 64], sizes = [4, 32], strides = [1, 1]} : vector<4x96xf32> to vector<4x32xf32>
    %279 = vector.extract_strided_slice %261 {offsets = [0, 64], sizes = [4, 32], strides = [1, 1]} : vector<4x96xf32> to vector<4x32xf32>
    %280 = arith.mulf %269, %279 : vector<4x32xf32>
    %281 = arith.addf %278, %280 : vector<4x32xf32>
    %282 = math.tanh %281 : vector<4x32xf32>
    %cst_55 = arith.constant 1.000000e+00 : f32
    %283 = vector.broadcast %cst_55 : f32 to vector<4x32xf32>
    %284 = arith.subf %283, %277 : vector<4x32xf32>
    %285 = arith.mulf %284, %282 : vector<4x32xf32>
    %286 = arith.mulf %277, %257 : vector<4x32xf32>
    %287 = arith.addf %285, %286 : vector<4x32xf32>
    %288 = vector.extract_strided_slice %254 {offsets = [4, 0], sizes = [4, 96], strides = [1, 1]} : vector<32x96xf32> to vector<4x96xf32>
    %cst_56 = arith.constant dense<0.000000e+00> : vector<4x96xf32>
    %289 = tpu.matmul %287, %255, %cst_56 {dimension_numbers = #tpu.dot_dimension_numbers<[1], [0], [0], [1], [0, 0, 1, 1], [], []>} : vector<4x32xf32>, vector<32x96xf32>, vector<4x96xf32> -> vector<4x96xf32>
    %290 = vector.broadcast %256 : vector<1x96xf32> to vector<4x96xf32>
    %291 = arith.addf %289, %290 : vector<4x96xf32>
    %292 = vector.extract_strided_slice %288 {offsets = [0, 0], sizes = [4, 32], strides = [1, 1]} : vector<4x96xf32> to vector<4x32xf32>
    %293 = vector.extract_strided_slice %291 {offsets = [0, 0], sizes = [4, 32], strides = [1, 1]} : vector<4x96xf32> to vector<4x32xf32>
    %294 = arith.addf %292, %293 : vector<4x32xf32>
    %295 = arith.negf %294 : vector<4x32xf32>
    %296 = math.exp %295 : vector<4x32xf32>
    %cst_57 = arith.constant 1.000000e+00 : f32
    %297 = vector.broadcast %cst_57 : f32 to vector<4x32xf32>
    %298 = arith.addf %297, %296 : vector<4x32xf32>
    %299 = arith.divf %297, %298 : vector<4x32xf32>
    %300 = vector.extract_strided_slice %288 {offsets = [0, 32], sizes = [4, 32], strides = [1, 1]} : vector<4x96xf32> to vector<4x32xf32>
    %301 = vector.extract_strided_slice %291 {offsets = [0, 32], sizes = [4, 32], strides = [1, 1]} : vector<4x96xf32> to vector<4x32xf32>
    %302 = arith.addf %300, %301 : vector<4x32xf32>
    %303 = arith.negf %302 : vector<4x32xf32>
    %304 = math.exp %303 : vector<4x32xf32>
    %cst_58 = arith.constant 1.000000e+00 : f32
    %305 = vector.broadcast %cst_58 : f32 to vector<4x32xf32>
    %306 = arith.addf %305, %304 : vector<4x32xf32>
    %307 = arith.divf %305, %306 : vector<4x32xf32>
    %308 = vector.extract_strided_slice %288 {offsets = [0, 64], sizes = [4, 32], strides = [1, 1]} : vector<4x96xf32> to vector<4x32xf32>
    %309 = vector.extract_strided_slice %291 {offsets = [0, 64], sizes = [4, 32], strides = [1, 1]} : vector<4x96xf32> to vector<4x32xf32>
    %310 = arith.mulf %299, %309 : vector<4x32xf32>
    %311 = arith.addf %308, %310 : vector<4x32xf32>
    %312 = math.tanh %311 : vector<4x32xf32>
    %cst_59 = arith.constant 1.000000e+00 : f32
    %313 = vector.broadcast %cst_59 : f32 to vector<4x32xf32>
    %314 = arith.subf %313, %307 : vector<4x32xf32>
    %315 = arith.mulf %314, %312 : vector<4x32xf32>
    %316 = arith.mulf %307, %287 : vector<4x32xf32>
    %317 = arith.addf %315, %316 : vector<4x32xf32>
    %318 = vector.extract_strided_slice %254 {offsets = [8, 0], sizes = [4, 96], strides = [1, 1]} : vector<32x96xf32> to vector<4x96xf32>
    %cst_60 = arith.constant dense<0.000000e+00> : vector<4x96xf32>
    %319 = tpu.matmul %317, %255, %cst_60 {dimension_numbers = #tpu.dot_dimension_numbers<[1], [0], [0], [1], [0, 0, 1, 1], [], []>} : vector<4x32xf32>, vector<32x96xf32>, vector<4x96xf32> -> vector<4x96xf32>
    %320 = vector.broadcast %256 : vector<1x96xf32> to vector<4x96xf32>
    %321 = arith.addf %319, %320 : vector<4x96xf32>
    %322 = vector.extract_strided_slice %318 {offsets = [0, 0], sizes = [4, 32], strides = [1, 1]} : vector<4x96xf32> to vector<4x32xf32>
    %323 = vector.extract_strided_slice %321 {offsets = [0, 0], sizes = [4, 32], strides = [1, 1]} : vector<4x96xf32> to vector<4x32xf32>
    %324 = arith.addf %322, %323 : vector<4x32xf32>
    %325 = arith.negf %324 : vector<4x32xf32>
    %326 = math.exp %325 : vector<4x32xf32>
    %cst_61 = arith.constant 1.000000e+00 : f32
    %327 = vector.broadcast %cst_61 : f32 to vector<4x32xf32>
    %328 = arith.addf %327, %326 : vector<4x32xf32>
    %329 = arith.divf %327, %328 : vector<4x32xf32>
    %330 = vector.extract_strided_slice %318 {offsets = [0, 32], sizes = [4, 32], strides = [1, 1]} : vector<4x96xf32> to vector<4x32xf32>
    %331 = vector.extract_strided_slice %321 {offsets = [0, 32], sizes = [4, 32], strides = [1, 1]} : vector<4x96xf32> to vector<4x32xf32>
    %332 = arith.addf %330, %331 : vector<4x32xf32>
    %333 = arith.negf %332 : vector<4x32xf32>
    %334 = math.exp %333 : vector<4x32xf32>
    %cst_62 = arith.constant 1.000000e+00 : f32
    %335 = vector.broadcast %cst_62 : f32 to vector<4x32xf32>
    %336 = arith.addf %335, %334 : vector<4x32xf32>
    %337 = arith.divf %335, %336 : vector<4x32xf32>
    %338 = vector.extract_strided_slice %318 {offsets = [0, 64], sizes = [4, 32], strides = [1, 1]} : vector<4x96xf32> to vector<4x32xf32>
    %339 = vector.extract_strided_slice %321 {offsets = [0, 64], sizes = [4, 32], strides = [1, 1]} : vector<4x96xf32> to vector<4x32xf32>
    %340 = arith.mulf %329, %339 : vector<4x32xf32>
    %341 = arith.addf %338, %340 : vector<4x32xf32>
    %342 = math.tanh %341 : vector<4x32xf32>
    %cst_63 = arith.constant 1.000000e+00 : f32
    %343 = vector.broadcast %cst_63 : f32 to vector<4x32xf32>
    %344 = arith.subf %343, %337 : vector<4x32xf32>
    %345 = arith.mulf %344, %342 : vector<4x32xf32>
    %346 = arith.mulf %337, %317 : vector<4x32xf32>
    %347 = arith.addf %345, %346 : vector<4x32xf32>
    %348 = vector.extract_strided_slice %254 {offsets = [12, 0], sizes = [4, 96], strides = [1, 1]} : vector<32x96xf32> to vector<4x96xf32>
    %cst_64 = arith.constant dense<0.000000e+00> : vector<4x96xf32>
    %349 = tpu.matmul %347, %255, %cst_64 {dimension_numbers = #tpu.dot_dimension_numbers<[1], [0], [0], [1], [0, 0, 1, 1], [], []>} : vector<4x32xf32>, vector<32x96xf32>, vector<4x96xf32> -> vector<4x96xf32>
    %350 = vector.broadcast %256 : vector<1x96xf32> to vector<4x96xf32>
    %351 = arith.addf %349, %350 : vector<4x96xf32>
    %352 = vector.extract_strided_slice %348 {offsets = [0, 0], sizes = [4, 32], strides = [1, 1]} : vector<4x96xf32> to vector<4x32xf32>
    %353 = vector.extract_strided_slice %351 {offsets = [0, 0], sizes = [4, 32], strides = [1, 1]} : vector<4x96xf32> to vector<4x32xf32>
    %354 = arith.addf %352, %353 : vector<4x32xf32>
    %355 = arith.negf %354 : vector<4x32xf32>
    %356 = math.exp %355 : vector<4x32xf32>
    %cst_65 = arith.constant 1.000000e+00 : f32
    %357 = vector.broadcast %cst_65 : f32 to vector<4x32xf32>
    %358 = arith.addf %357, %356 : vector<4x32xf32>
    %359 = arith.divf %357, %358 : vector<4x32xf32>
    %360 = vector.extract_strided_slice %348 {offsets = [0, 32], sizes = [4, 32], strides = [1, 1]} : vector<4x96xf32> to vector<4x32xf32>
    %361 = vector.extract_strided_slice %351 {offsets = [0, 32], sizes = [4, 32], strides = [1, 1]} : vector<4x96xf32> to vector<4x32xf32>
    %362 = arith.addf %360, %361 : vector<4x32xf32>
    %363 = arith.negf %362 : vector<4x32xf32>
    %364 = math.exp %363 : vector<4x32xf32>
    %cst_66 = arith.constant 1.000000e+00 : f32
    %365 = vector.broadcast %cst_66 : f32 to vector<4x32xf32>
    %366 = arith.addf %365, %364 : vector<4x32xf32>
    %367 = arith.divf %365, %366 : vector<4x32xf32>
    %368 = vector.extract_strided_slice %348 {offsets = [0, 64], sizes = [4, 32], strides = [1, 1]} : vector<4x96xf32> to vector<4x32xf32>
    %369 = vector.extract_strided_slice %351 {offsets = [0, 64], sizes = [4, 32], strides = [1, 1]} : vector<4x96xf32> to vector<4x32xf32>
    %370 = arith.mulf %359, %369 : vector<4x32xf32>
    %371 = arith.addf %368, %370 : vector<4x32xf32>
    %372 = math.tanh %371 : vector<4x32xf32>
    %cst_67 = arith.constant 1.000000e+00 : f32
    %373 = vector.broadcast %cst_67 : f32 to vector<4x32xf32>
    %374 = arith.subf %373, %367 : vector<4x32xf32>
    %375 = arith.mulf %374, %372 : vector<4x32xf32>
    %376 = arith.mulf %367, %347 : vector<4x32xf32>
    %377 = arith.addf %375, %376 : vector<4x32xf32>
    %378 = vector.extract_strided_slice %254 {offsets = [16, 0], sizes = [4, 96], strides = [1, 1]} : vector<32x96xf32> to vector<4x96xf32>
    %cst_68 = arith.constant dense<0.000000e+00> : vector<4x96xf32>
    %379 = tpu.matmul %377, %255, %cst_68 {dimension_numbers = #tpu.dot_dimension_numbers<[1], [0], [0], [1], [0, 0, 1, 1], [], []>} : vector<4x32xf32>, vector<32x96xf32>, vector<4x96xf32> -> vector<4x96xf32>
    %380 = vector.broadcast %256 : vector<1x96xf32> to vector<4x96xf32>
    %381 = arith.addf %379, %380 : vector<4x96xf32>
    %382 = vector.extract_strided_slice %378 {offsets = [0, 0], sizes = [4, 32], strides = [1, 1]} : vector<4x96xf32> to vector<4x32xf32>
    %383 = vector.extract_strided_slice %381 {offsets = [0, 0], sizes = [4, 32], strides = [1, 1]} : vector<4x96xf32> to vector<4x32xf32>
    %384 = arith.addf %382, %383 : vector<4x32xf32>
    %385 = arith.negf %384 : vector<4x32xf32>
    %386 = math.exp %385 : vector<4x32xf32>
    %cst_69 = arith.constant 1.000000e+00 : f32
    %387 = vector.broadcast %cst_69 : f32 to vector<4x32xf32>
    %388 = arith.addf %387, %386 : vector<4x32xf32>
    %389 = arith.divf %387, %388 : vector<4x32xf32>
    %390 = vector.extract_strided_slice %378 {offsets = [0, 32], sizes = [4, 32], strides = [1, 1]} : vector<4x96xf32> to vector<4x32xf32>
    %391 = vector.extract_strided_slice %381 {offsets = [0, 32], sizes = [4, 32], strides = [1, 1]} : vector<4x96xf32> to vector<4x32xf32>
    %392 = arith.addf %390, %391 : vector<4x32xf32>
    %393 = arith.negf %392 : vector<4x32xf32>
    %394 = math.exp %393 : vector<4x32xf32>
    %cst_70 = arith.constant 1.000000e+00 : f32
    %395 = vector.broadcast %cst_70 : f32 to vector<4x32xf32>
    %396 = arith.addf %395, %394 : vector<4x32xf32>
    %397 = arith.divf %395, %396 : vector<4x32xf32>
    %398 = vector.extract_strided_slice %378 {offsets = [0, 64], sizes = [4, 32], strides = [1, 1]} : vector<4x96xf32> to vector<4x32xf32>
    %399 = vector.extract_strided_slice %381 {offsets = [0, 64], sizes = [4, 32], strides = [1, 1]} : vector<4x96xf32> to vector<4x32xf32>
    %400 = arith.mulf %389, %399 : vector<4x32xf32>
    %401 = arith.addf %398, %400 : vector<4x32xf32>
    %402 = math.tanh %401 : vector<4x32xf32>
    %cst_71 = arith.constant 1.000000e+00 : f32
    %403 = vector.broadcast %cst_71 : f32 to vector<4x32xf32>
    %404 = arith.subf %403, %397 : vector<4x32xf32>
    %405 = arith.mulf %404, %402 : vector<4x32xf32>
    %406 = arith.mulf %397, %377 : vector<4x32xf32>
    %407 = arith.addf %405, %406 : vector<4x32xf32>
    %408 = vector.extract_strided_slice %254 {offsets = [20, 0], sizes = [4, 96], strides = [1, 1]} : vector<32x96xf32> to vector<4x96xf32>
    %cst_72 = arith.constant dense<0.000000e+00> : vector<4x96xf32>
    %409 = tpu.matmul %407, %255, %cst_72 {dimension_numbers = #tpu.dot_dimension_numbers<[1], [0], [0], [1], [0, 0, 1, 1], [], []>} : vector<4x32xf32>, vector<32x96xf32>, vector<4x96xf32> -> vector<4x96xf32>
    %410 = vector.broadcast %256 : vector<1x96xf32> to vector<4x96xf32>
    %411 = arith.addf %409, %410 : vector<4x96xf32>
    %412 = vector.extract_strided_slice %408 {offsets = [0, 0], sizes = [4, 32], strides = [1, 1]} : vector<4x96xf32> to vector<4x32xf32>
    %413 = vector.extract_strided_slice %411 {offsets = [0, 0], sizes = [4, 32], strides = [1, 1]} : vector<4x96xf32> to vector<4x32xf32>
    %414 = arith.addf %412, %413 : vector<4x32xf32>
    %415 = arith.negf %414 : vector<4x32xf32>
    %416 = math.exp %415 : vector<4x32xf32>
    %cst_73 = arith.constant 1.000000e+00 : f32
    %417 = vector.broadcast %cst_73 : f32 to vector<4x32xf32>
    %418 = arith.addf %417, %416 : vector<4x32xf32>
    %419 = arith.divf %417, %418 : vector<4x32xf32>
    %420 = vector.extract_strided_slice %408 {offsets = [0, 32], sizes = [4, 32], strides = [1, 1]} : vector<4x96xf32> to vector<4x32xf32>
    %421 = vector.extract_strided_slice %411 {offsets = [0, 32], sizes = [4, 32], strides = [1, 1]} : vector<4x96xf32> to vector<4x32xf32>
    %422 = arith.addf %420, %421 : vector<4x32xf32>
    %423 = arith.negf %422 : vector<4x32xf32>
    %424 = math.exp %423 : vector<4x32xf32>
    %cst_74 = arith.constant 1.000000e+00 : f32
    %425 = vector.broadcast %cst_74 : f32 to vector<4x32xf32>
    %426 = arith.addf %425, %424 : vector<4x32xf32>
    %427 = arith.divf %425, %426 : vector<4x32xf32>
    %428 = vector.extract_strided_slice %408 {offsets = [0, 64], sizes = [4, 32], strides = [1, 1]} : vector<4x96xf32> to vector<4x32xf32>
    %429 = vector.extract_strided_slice %411 {offsets = [0, 64], sizes = [4, 32], strides = [1, 1]} : vector<4x96xf32> to vector<4x32xf32>
    %430 = arith.mulf %419, %429 : vector<4x32xf32>
    %431 = arith.addf %428, %430 : vector<4x32xf32>
    %432 = math.tanh %431 : vector<4x32xf32>
    %cst_75 = arith.constant 1.000000e+00 : f32
    %433 = vector.broadcast %cst_75 : f32 to vector<4x32xf32>
    %434 = arith.subf %433, %427 : vector<4x32xf32>
    %435 = arith.mulf %434, %432 : vector<4x32xf32>
    %436 = arith.mulf %427, %407 : vector<4x32xf32>
    %437 = arith.addf %435, %436 : vector<4x32xf32>
    %438 = vector.extract_strided_slice %254 {offsets = [24, 0], sizes = [4, 96], strides = [1, 1]} : vector<32x96xf32> to vector<4x96xf32>
    %cst_76 = arith.constant dense<0.000000e+00> : vector<4x96xf32>
    %439 = tpu.matmul %437, %255, %cst_76 {dimension_numbers = #tpu.dot_dimension_numbers<[1], [0], [0], [1], [0, 0, 1, 1], [], []>} : vector<4x32xf32>, vector<32x96xf32>, vector<4x96xf32> -> vector<4x96xf32>
    %440 = vector.broadcast %256 : vector<1x96xf32> to vector<4x96xf32>
    %441 = arith.addf %439, %440 : vector<4x96xf32>
    %442 = vector.extract_strided_slice %438 {offsets = [0, 0], sizes = [4, 32], strides = [1, 1]} : vector<4x96xf32> to vector<4x32xf32>
    %443 = vector.extract_strided_slice %441 {offsets = [0, 0], sizes = [4, 32], strides = [1, 1]} : vector<4x96xf32> to vector<4x32xf32>
    %444 = arith.addf %442, %443 : vector<4x32xf32>
    %445 = arith.negf %444 : vector<4x32xf32>
    %446 = math.exp %445 : vector<4x32xf32>
    %cst_77 = arith.constant 1.000000e+00 : f32
    %447 = vector.broadcast %cst_77 : f32 to vector<4x32xf32>
    %448 = arith.addf %447, %446 : vector<4x32xf32>
    %449 = arith.divf %447, %448 : vector<4x32xf32>
    %450 = vector.extract_strided_slice %438 {offsets = [0, 32], sizes = [4, 32], strides = [1, 1]} : vector<4x96xf32> to vector<4x32xf32>
    %451 = vector.extract_strided_slice %441 {offsets = [0, 32], sizes = [4, 32], strides = [1, 1]} : vector<4x96xf32> to vector<4x32xf32>
    %452 = arith.addf %450, %451 : vector<4x32xf32>
    %453 = arith.negf %452 : vector<4x32xf32>
    %454 = math.exp %453 : vector<4x32xf32>
    %cst_78 = arith.constant 1.000000e+00 : f32
    %455 = vector.broadcast %cst_78 : f32 to vector<4x32xf32>
    %456 = arith.addf %455, %454 : vector<4x32xf32>
    %457 = arith.divf %455, %456 : vector<4x32xf32>
    %458 = vector.extract_strided_slice %438 {offsets = [0, 64], sizes = [4, 32], strides = [1, 1]} : vector<4x96xf32> to vector<4x32xf32>
    %459 = vector.extract_strided_slice %441 {offsets = [0, 64], sizes = [4, 32], strides = [1, 1]} : vector<4x96xf32> to vector<4x32xf32>
    %460 = arith.mulf %449, %459 : vector<4x32xf32>
    %461 = arith.addf %458, %460 : vector<4x32xf32>
    %462 = math.tanh %461 : vector<4x32xf32>
    %cst_79 = arith.constant 1.000000e+00 : f32
    %463 = vector.broadcast %cst_79 : f32 to vector<4x32xf32>
    %464 = arith.subf %463, %457 : vector<4x32xf32>
    %465 = arith.mulf %464, %462 : vector<4x32xf32>
    %466 = arith.mulf %457, %437 : vector<4x32xf32>
    %467 = arith.addf %465, %466 : vector<4x32xf32>
    %468 = vector.extract_strided_slice %254 {offsets = [28, 0], sizes = [4, 96], strides = [1, 1]} : vector<32x96xf32> to vector<4x96xf32>
    %cst_80 = arith.constant dense<0.000000e+00> : vector<4x96xf32>
    %469 = tpu.matmul %467, %255, %cst_80 {dimension_numbers = #tpu.dot_dimension_numbers<[1], [0], [0], [1], [0, 0, 1, 1], [], []>} : vector<4x32xf32>, vector<32x96xf32>, vector<4x96xf32> -> vector<4x96xf32>
    %470 = vector.broadcast %256 : vector<1x96xf32> to vector<4x96xf32>
    %471 = arith.addf %469, %470 : vector<4x96xf32>
    %472 = vector.extract_strided_slice %468 {offsets = [0, 0], sizes = [4, 32], strides = [1, 1]} : vector<4x96xf32> to vector<4x32xf32>
    %473 = vector.extract_strided_slice %471 {offsets = [0, 0], sizes = [4, 32], strides = [1, 1]} : vector<4x96xf32> to vector<4x32xf32>
    %474 = arith.addf %472, %473 : vector<4x32xf32>
    %475 = arith.negf %474 : vector<4x32xf32>
    %476 = math.exp %475 : vector<4x32xf32>
    %cst_81 = arith.constant 1.000000e+00 : f32
    %477 = vector.broadcast %cst_81 : f32 to vector<4x32xf32>
    %478 = arith.addf %477, %476 : vector<4x32xf32>
    %479 = arith.divf %477, %478 : vector<4x32xf32>
    %480 = vector.extract_strided_slice %468 {offsets = [0, 32], sizes = [4, 32], strides = [1, 1]} : vector<4x96xf32> to vector<4x32xf32>
    %481 = vector.extract_strided_slice %471 {offsets = [0, 32], sizes = [4, 32], strides = [1, 1]} : vector<4x96xf32> to vector<4x32xf32>
    %482 = arith.addf %480, %481 : vector<4x32xf32>
    %483 = arith.negf %482 : vector<4x32xf32>
    %484 = math.exp %483 : vector<4x32xf32>
    %cst_82 = arith.constant 1.000000e+00 : f32
    %485 = vector.broadcast %cst_82 : f32 to vector<4x32xf32>
    %486 = arith.addf %485, %484 : vector<4x32xf32>
    %487 = arith.divf %485, %486 : vector<4x32xf32>
    %488 = vector.extract_strided_slice %468 {offsets = [0, 64], sizes = [4, 32], strides = [1, 1]} : vector<4x96xf32> to vector<4x32xf32>
    %489 = vector.extract_strided_slice %471 {offsets = [0, 64], sizes = [4, 32], strides = [1, 1]} : vector<4x96xf32> to vector<4x32xf32>
    %490 = arith.mulf %479, %489 : vector<4x32xf32>
    %491 = arith.addf %488, %490 : vector<4x32xf32>
    %492 = math.tanh %491 : vector<4x32xf32>
    %cst_83 = arith.constant 1.000000e+00 : f32
    %493 = vector.broadcast %cst_83 : f32 to vector<4x32xf32>
    %494 = arith.subf %493, %487 : vector<4x32xf32>
    %495 = arith.mulf %494, %492 : vector<4x32xf32>
    %496 = arith.mulf %487, %467 : vector<4x32xf32>
    %497 = arith.addf %495, %496 : vector<4x32xf32>
    %498 = tpu.concatenate %287, %317, %347, %377, %407, %437, %467, %497 in 0 : vector<4x32xf32>, vector<4x32xf32>, vector<4x32xf32>, vector<4x32xf32>, vector<4x32xf32>, vector<4x32xf32>, vector<4x32xf32>, vector<4x32xf32> -> vector<32x32xf32>
    %c0_84 = arith.constant 0 : index
    %c0_85 = arith.constant 0 : index
    %499 = vector.load %arg9[%c0_84, %c0_85] : memref<32x32xf32, #tpu.memory_space<vmem>>, vector<32x32xf32>
    %cst_86 = arith.constant dense<0.000000e+00> : vector<32x32xf32>
    %500 = tpu.matmul %498, %499, %cst_86 {dimension_numbers = #tpu.dot_dimension_numbers<[1], [0], [0], [1], [0, 0, 1, 1], [], []>} : vector<32x32xf32>, vector<32x32xf32>, vector<32x32xf32> -> vector<32x32xf32>
    %c0_87 = arith.constant 0 : index
    %c0_88 = arith.constant 0 : index
    %501 = vector.load %arg10[%c0_87, %c0_88] : memref<1x32xf32, #tpu.memory_space<vmem>>, vector<1x32xf32>
    %502 = vector.broadcast %501 : vector<1x32xf32> to vector<32x32xf32>
    %503 = arith.addf %500, %502 : vector<32x32xf32>
    %cst_89 = arith.constant 0.000000e+00 : f32
    %504 = vector.broadcast %cst_89 : f32 to vector<32x32xf32>
    %505 = arith.maximumf %503, %504 : vector<32x32xf32>
    %c0_90 = arith.constant 0 : index
    %c0_91 = arith.constant 0 : index
    %506 = vector.load %arg11[%c0_90, %c0_91] : memref<1x32xf32, #tpu.memory_space<vmem>>, vector<1x32xf32>
    %507 = vector.broadcast %506 : vector<1x32xf32> to vector<32x32xf32>
    %508 = arith.mulf %505, %507 : vector<32x32xf32>
    %cst_92 = arith.constant dense<0.000000e+00> : vector<32xf32>
    %509 = vector.multi_reduction <add>, %508, %cst_92 [1] : vector<32x32xf32> to vector<32xf32>
    %510 = vector.shape_cast %509 : vector<32xf32> to vector<32x1xf32>
    %c0_93 = arith.constant 0 : index
    %c0_94 = arith.constant 0 : index
    %511 = vector.load %arg12[%c0_93, %c0_94] : memref<1x1xf32, #tpu.memory_space<vmem>>, vector<1x1xf32>
    %512 = vector.broadcast %511 : vector<1x1xf32> to vector<32x1xf32>
    %513 = arith.addf %510, %512 : vector<32x1xf32>
    %514 = vector.shape_cast %513 : vector<32x1xf32> to vector<32x1xf32>
    %515 = vector.broadcast %514 : vector<32x1xf32> to vector<32x128xf32>
    %c0_95 = arith.constant 0 : index
    %c0_96 = arith.constant 0 : index
    %516 = vector.load %arg13[%c0_95, %c0_96] : memref<32x128xf32, #tpu.memory_space<vmem>>, vector<32x128xf32>
    tpu.vector_store %arg13[%c0_95, %c0_96], %515 {strides = array<i32>} : memref<32x128xf32, #tpu.memory_space<vmem>>, vector<32x128xf32>,
    return
  }
}

</mosaic_0001>

<llo_original>
// kernel: squeeze.1
$region0: #{squeeze.1}
  %s0 = inlined_call_operand.vmem [shape: f32[32], index: 0, kind: input, shape index: {}]
  %s1 = inlined_call_operand.vmem [shape: f32[8,4], index: 1, kind: output, shape index: {}]
  $region1: #{squeeze.1} parent=0
    #allocation0 [shape = 'u8[4096]{0}', space=vmem, size = 0x1000, scoped, tag = 'scoped mem for input reshape']
    %s3 = sshllo.u32 0, 1
    %v4 = vld [vmem:[%s0] sm:%s3]
    %5 = vst [vmem:[#allocation0] sm:%s3] %v4
    %v6 = vld [vmem:[#allocation0] sm:$0x1]
    %vm7 = vcmask 31744
    %8 = vst.msk [vmem:[%s1] sm:$0x1] %vm7, %v6
    %v9 = vld [vmem:[#allocation0] sm:$0x1]
    %10 = vrot.lane.b32.xlu0 %v9, 124
    %v11 = vpop.permute.xlu0 %10
    %vm12 = vcmask 31744
    %s13 = scalar_lea.vmem %s1, 1
    %14 = vst.msk [vmem:[%s13] sm:$0x1] %vm12, %v11
    %v15 = vld [vmem:[#allocation0] sm:$0x1]
    %16 = vrot.lane.b32.xlu0 %v15, 120
    %v17 = vpop.permute.xlu0 %16
    %vm18 = vcmask 31744
    %s19 = scalar_lea.vmem %s1, 2
    %20 = vst.msk [vmem:[%s19] sm:$0x1] %vm18, %v17
    %v21 = vld [vmem:[#allocation0] sm:$0x1]
    %22 = vrot.lane.b32.xlu0 %v21, 116
    %v23 = vpop.permute.xlu0 %22
    %vm24 = vcmask 31744
    %s25 = scalar_lea.vmem %s1, 3
    %26 = vst.msk [vmem:[%s25] sm:$0x1] %vm24, %v23
    %v27 = vld [vmem:[#allocation0] sm:$0x1]
    %28 = vrot.lane.b32.xlu0 %v27, 112
    %v29 = vpop.permute.xlu0 %28
    %vm30 = vcmask 31744
    %s31 = scalar_lea.vmem %s1, 4
    %32 = vst.msk [vmem:[%s31] sm:$0x1] %vm30, %v29
    %v33 = vld [vmem:[#allocation0] sm:$0x1]
    %34 = vrot.lane.b32.xlu0 %v33, 108
    %v35 = vpop.permute.xlu0 %34
    %vm36 = vcmask 31744
    %s37 = scalar_lea.vmem %s1, 5
    %38 = vst.msk [vmem:[%s37] sm:$0x1] %vm36, %v35
    %v39 = vld [vmem:[#allocation0] sm:$0x1]
    %40 = vrot.lane.b32.xlu0 %v39, 104
    %v41 = vpop.permute.xlu0 %40
    %vm42 = vcmask 31744
    %s43 = scalar_lea.vmem %s1, 6
    %44 = vst.msk [vmem:[%s43] sm:$0x1] %vm42, %v41
    %v45 = vld [vmem:[#allocation0] sm:$0x1]
    %46 = vrot.lane.b32.xlu0 %v45, 100
    %v47 = vpop.permute.xlu0 %46
    %vm48 = vcmask 31744
    %s49 = scalar_lea.vmem %s1, 7
    %50 = vst.msk [vmem:[%s49] sm:$0x1] %vm48, %v47

// kernel: gru_regressor_forward.1
$region0: #{gru_regressor_forward.1}
  #allocation0 [shape = 'u32[]', space=smem, size = 0x4, offset = 0x4, fixed_abs, tag = 'smem constant byte address 0x4 - core index']
  #allocation1 [shape = 'u32[144,128]{1,0:T(1,128)}', space=vmem, size = 0x12000, scoped, tag = 'internal scratch']
  #allocation2 [shape = 'f32[1,1]{1,0:T(1,128)S(1)}', space=vmem, size = 0x200, scoped, tag = 'scoped memory for gru_regressor_forward.1']
  %s0 = inlined_call_operand.vmem [shape: f32[32,40], index: 0, kind: input, shape index: {}]
  %s1 = inlined_call_operand.vmem [shape: f32[40,96], index: 1, kind: input, shape index: {}]
  %s2 = inlined_call_operand.vmem [shape: f32[32,96], index: 2, kind: input, shape index: {}]
  %s3 = inlined_call_operand.vmem [shape: f32[1,96], index: 3, kind: input, shape index: {}]
  %s4 = inlined_call_operand.vmem [shape: f32[1,96], index: 4, kind: input, shape index: {}]
  %s5 = inlined_call_operand.vmem [shape: f32[32,96], index: 5, kind: input, shape index: {}]
  %s6 = inlined_call_operand.vmem [shape: f32[32,96], index: 6, kind: input, shape index: {}]
  %s7 = inlined_call_operand.vmem [shape: f32[1,96], index: 7, kind: input, shape index: {}]
  %s8 = inlined_call_operand.vmem [shape: f32[1,96], index: 8, kind: input, shape index: {}]
  %s9 = inlined_call_operand.vmem [shape: f32[32,32], index: 9, kind: input, shape index: {}]
  %s10 = inlined_call_operand.vmem [shape: f32[1,32], index: 10, kind: input, shape index: {}]
  %s11 = inlined_call_operand.vmem [shape: f32[1,32], index: 11, kind: input, shape index: {}]
  %s12 = inlined_call_operand.<no memory space> [shape: f32[1,1], index: 12, kind: input, shape index: {}]
  %s13 = inlined_call_operand.vmem [shape: f32[32,128], index: 13, kind: output, shape index: {}]
  %s14 = sld [smem:[#allocation0]]
  $region62: #{gru_regressor_forward.1} parent=0
    _
  %s16 = ssub.s32 1, %s14
  %s17 = scalar_select 0, %s16, %s14
  %v18 = vstv %s12
  %19 = vst [vmem:[#allocation2] sm:$0x1] %v18
  // Predicated region
  $region2: #{gru_regressor_forward.1} parent=0 // pred_check
    _
  $region3: #{gru_regressor_forward.1} parent=0 // pred_check_branch
    %21 = sbr.rel (0) target = $region5
  $region4: #{gru_regressor_forward.1} parent=0 // pred_region
    _
  $region5: #{gru_regressor_forward.1} parent=0 // pred_fallthru
    _
  // Predicated region
  $region6: #{gru_regressor_forward.1} parent=0 // pred_check
    _
  $region7: #{gru_regressor_forward.1} parent=0 // pred_check_branch
    %23 = sbr.rel (0) target = $region9
  $region8: #{gru_regressor_forward.1} parent=0 // pred_region
    _
  $region9: #{gru_regressor_forward.1} parent=0 // pred_fallthru
    _
  // Predicated region
  $region10: #{gru_regressor_forward.1} parent=0 // pred_check
    _
  $region11: #{gru_regressor_forward.1} parent=0 // pred_check_branch
    %25 = sbr.rel (0) target = $region13
  $region12: #{gru_regressor_forward.1} parent=0 // pred_region
    _
  $region13: #{gru_regressor_forward.1} parent=0 // pred_fallthru
    _
  // Predicated region
  $region14: #{gru_regressor_forward.1} parent=0 // pred_check
    _
  $region15: #{gru_regressor_forward.1} parent=0 // pred_check_branch
    %27 = sbr.rel (0) target = $region17
  $region16: #{gru_regressor_forward.1} parent=0 // pred_region
    _
  $region17: #{gru_regressor_forward.1} parent=0 // pred_fallthru
    _
  // Predicated region
  $region18: #{gru_regressor_forward.1} parent=0 // pred_check
    _
  $region19: #{gru_regressor_forward.1} parent=0 // pred_check_branch
    %29 = sbr.rel (0) target = $region21
  $region20: #{gru_regressor_forward.1} parent=0 // pred_region
    _
  $region21: #{gru_regressor_forward.1} parent=0 // pred_fallthru
    _
  // Predicated region
  $region22: #{gru_regressor_forward.1} parent=0 // pred_check
    _
  $region23: #{gru_regressor_forward.1} parent=0 // pred_check_branch
    %31 = sbr.rel (0) target = $region25
  $region24: #{gru_regressor_forward.1} parent=0 // pred_region
    _
  $region25: #{gru_regressor_forward.1} parent=0 // pred_fallthru
    _
  // Predicated region
  $region26: #{gru_regressor_forward.1} parent=0 // pred_check
    _
  $region27: #{gru_regressor_forward.1} parent=0 // pred_check_branch
    %33 = sbr.rel (0) target = $region29
  $region28: #{gru_regressor_forward.1} parent=0 // pred_region
    _
  $region29: #{gru_regressor_forward.1} parent=0 // pred_fallthru
    _
  // Predicated region
  $region30: #{gru_regressor_forward.1} parent=0 // pred_check
    _
  $region31: #{gru_regressor_forward.1} parent=0 // pred_check_branch
    %35 = sbr.rel (0) target = $region33
  $region32: #{gru_regressor_forward.1} parent=0 // pred_region
    _
  $region33: #{gru_regressor_forward.1} parent=0 // pred_fallthru
    _
  // Predicated region
  $region34: #{gru_regressor_forward.1} parent=0 // pred_check
    _
  $region35: #{gru_regressor_forward.1} parent=0 // pred_check_branch
    %37 = sbr.rel (0) target = $region37
  $region36: #{gru_regressor_forward.1} parent=0 // pred_region
    _
  $region37: #{gru_regressor_forward.1} parent=0 // pred_fallthru
    _
  // Predicated region
  $region38: #{gru_regressor_forward.1} parent=0 // pred_check
    _
  $region39: #{gru_regressor_forward.1} parent=0 // pred_check_branch
    %39 = sbr.rel (0) target = $region41
  $region40: #{gru_regressor_forward.1} parent=0 // pred_region
    _
  $region41: #{gru_regressor_forward.1} parent=0 // pred_fallthru
    _
  // Predicated region
  $region42: #{gru_regressor_forward.1} parent=0 // pred_check
    _
  $region43: #{gru_regressor_forward.1} parent=0 // pred_check_branch
    %41 = sbr.rel (0) target = $region45
  $region44: #{gru_regressor_forward.1} parent=0 // pred_region
    _
  $region45: #{gru_regressor_forward.1} parent=0 // pred_fallthru
    _
  // Predicated region
  $region46: #{gru_regressor_forward.1} parent=0 // pred_check
    _
  $region47: #{gru_regressor_forward.1} parent=0 // pred_check_branch
    %43 = sbr.rel (0) target = $region49
  $region48: #{gru_regressor_forward.1} parent=0 // pred_region
    _
  $region49: #{gru_regressor_forward.1} parent=0 // pred_fallthru
    _
  // Predicated region
  $region50: #{gru_regressor_forward.1} parent=0 // pred_check
    _
  $region51: #{gru_regressor_forward.1} parent=0 // pred_check_branch
    %45 = sbr.rel (0) target = $region53
  $region52: #{gru_regressor_forward.1} parent=0 // pred_region
    _
  $region53: #{gru_regressor_forward.1} parent=0 // pred_fallthru
    _
  %v46 = vld [vmem:[%s0] sm:$0xff]
  %v47 = vld [vmem:[%s0 + $0x8] sm:$0xff]
  %v48 = vld [vmem:[%s0 + $0x10] sm:$0xff]
  %v49 = vld [vmem:[%s0 + $0x18] sm:$0xff]
  %v50 = vld [vmem:[%s1] sm:$0xff]
  %v51 = vld [vmem:[%s1 + $0x8] sm:$0xff]
  %v52 = vld [vmem:[%s1 + $0x10] sm:$0xff]
  %v53 = vld [vmem:[%s1 + $0x18] sm:$0xff]
  %v54 = vld [vmem:[%s1 + $0x20] sm:$0xff]
  %v55 = vld [vmem:[%s3] sm:$0x1]
  %v57 = vlaneseq
  %v58 = vshrl.u32 %v57, 7
  %v59 = vsub.s32 0, %v58
  %v60 = vrot.slane %v55, %v59
  %vm62 = vcmask 326656
  %v64 = vsel %vm62, %v46, 0
  %v67 = vsel %vm62, %v47, 0
  %v70 = vsel %vm62, %v48, 0
  %v73 = vsel %vm62, %v49, 0
  %75 = vmatprep.subr.mxu0 0.0
  %76 = vmatpush1.msra.mxu0 %v50
  %77 = vmatprep.subr.mxu0 0.0
  %78 = vmatpush1.msra.mxu0 %v51
  %79 = vmatprep.subr.mxu0 0.0
  %80 = vmatpush1.msra.mxu0 %v52
  %81 = vmatprep.subr.mxu0 0.0
  %82 = vmatpush1.msra.mxu0 %v53
  %83 = vmatprep.subr.mxu0 0.0
  %84 = vmatpush1.msra.mxu0 %v54
  %85 = vmatprep.subr.mxu0 0.0
  %86 = vmatpush1.msra.mxu0 0.0
  %87 = vmatprep.subr.mxu0 0.0
  %88 = vmatpush1.msra.mxu0 0.0
  %89 = vmatprep.subr.mxu0 0.0
  %90 = vmatpush1.msra.mxu0 0.0
  %91 = vmatprep.subr.mxu0 0.0
  %92 = vmatpush1.msra.mxu0 0.0
  %93 = vmatprep.subr.mxu0 0.0
  %94 = vmatpush1.msra.mxu0 0.0
  %95 = vmatprep.subr.mxu0 0.0
  %96 = vmatpush1.msra.mxu0 0.0
  %97 = vmatprep.subr.mxu0 0.0
  %98 = vmatpush1.msra.mxu0 0.0
  %99 = vmatprep.subr.mxu0 0.0
  %100 = vmatpush1.msra.mxu0 0.0
  %101 = vmatprep.subr.mxu0 0.0
  %102 = vmatpush1.msra.mxu0 0.0
  %103 = vmatprep.subr.mxu0 0.0
  %104 = vmatpush1.msra.mxu0 0.0
  %105 = vmatprep.subr.mxu0 0.0
  %106 = vmatpush1.msra.mxu0 0.0
  %107 = vmatprep.subr.mxu0 0.0
  %108 = vmatpush1.msra.mxu0 0.0
  %109 = vmatprep.subr.mxu0 0.0
  %110 = vmatpush1.msra.mxu0 0.0
  %111 = vmatprep.subr.mxu0 0.0
  %112 = vmatpush1.msra.mxu0 0.0
  %113 = vmatprep.subr.mxu0 0.0
  %114 = vmatpush1.msra.mxu0 0.0
  %115 = vmatprep.subr.mxu0 0.0
  %116 = vmatpush1.msra.mxu0 0.0
  %117 = vmatprep.subr.mxu0 0.0
  %118 = vmatpush1.msra.mxu0 0.0
  %119 = vmatprep.subr.mxu0 0.0
  %120 = vmatpush1.msra.mxu0 0.0
  %121 = vmatprep.subr.mxu0 0.0
  %122 = vmatpush1.msra.mxu0 0.0
  %123 = vmatprep.subr.mxu0 0.0
  %124 = vmatpush1.msra.mxu0 0.0
  %125 = vmatprep.subr.mxu0 0.0
  %126 = vmatpush1.msra.mxu0 0.0
  %127 = vmatprep.subr.mxu0 0.0
  %128 = vmatpush1.msra.mxu0 0.0
  %129 = vmatprep.subr.mxu0 0.0
  %130 = vmatpush1.msra.mxu0 0.0
  %131 = vmatprep.subr.mxu0 0.0
  %132 = vmatpush1.msra.mxu0 0.0
  %133 = vmatprep.subr.mxu0 0.0
  %134 = vmatpush1.msra.mxu0 0.0
  %135 = vmatprep.subr.mxu0 0.0
  %136 = vmatpush1.msra.mxu0 0.0
  %137 = vmatprep.subr.mxu0 0.0
  %138 = vmatpush1.msra.mxu0 0.0
  %139 = vmatprep.mubr.f32.mxu0 0.0
  %140 = vmatmul.mubr.f32.gmra.mrb[0].mxu0 %v64
  %v141 = vpop.f32.mrb[0].mxu0
  %v142 = vadd.f32 %v60, %v141
  %v143 = vpop.f32.mrb[0].mxu0
  %144 = vmatprep.mubr.f32.mxu0 0.0
  %145 = vmatmul.mubr.f32.gmra.mrb[0].mxu0 %v67
  %v146 = vpop.f32.mrb[0].mxu0
  %v147 = vadd.f32 %v60, %v146
  %v148 = vpop.f32.mrb[0].mxu0
  %149 = vmatprep.mubr.f32.mxu0 0.0
  %150 = vmatmul.mubr.f32.gmra.mrb[0].mxu0 %v70
  %v151 = vpop.f32.mrb[0].mxu0
  %v152 = vadd.f32 %v60, %v151
  %v153 = vpop.f32.mrb[0].mxu0
  %154 = vmatprep.mubr.f32.mxu0 0.0
  %155 = vmatmul.mubr.f32.gmra.mrb[0].mxu0 %v73
  %v156 = vpop.f32.mrb[0].mxu0
  %v157 = vadd.f32 %v60, %v156
  %v158 = vpop.f32.mrb[0].mxu0
  %159 = vdwg.mxu0
  %v160 = vld [vmem:[%s2] sm:$0xff]
  %v161 = vld [vmem:[%s2 + $0x8] sm:$0xff]
  %v162 = vld [vmem:[%s2 + $0x10] sm:$0xff]
  %v163 = vld [vmem:[%s2 + $0x18] sm:$0xff]
  %v164 = vld [vmem:[%s4] sm:$0x1]
  %v166 = vlaneseq
  %v167 = vshrl.u32 %v166, 7
  %v168 = vsub.s32 0, %v167
  %v169 = vrot.slane %v164, %v168
  %vm171 = vcmask 261120
  %v173 = vsel %vm171, 0.0, 0
  %175 = vmatprep.subr.mxu0 0.0
  %176 = vmatpush1.msra.mxu0 %v160
  %177 = vmatprep.subr.mxu0 0.0
  %178 = vmatpush1.msra.mxu0 %v161
  %179 = vmatprep.subr.mxu0 0.0
  %180 = vmatpush1.msra.mxu0 %v162
  %181 = vmatprep.subr.mxu0 0.0
  %182 = vmatpush1.msra.mxu0 %v163
  %183 = vmatprep.subr.mxu0 0.0
  %184 = vmatpush1.msra.mxu0 0.0
  %185 = vmatprep.subr.mxu0 0.0
  %186 = vmatpush1.msra.mxu0 0.0
  %187 = vmatprep.subr.mxu0 0.0
  %188 = vmatpush1.msra.mxu0 0.0
  %189 = vmatprep.subr.mxu0 0.0
  %190 = vmatpush1.msra.mxu0 0.0
  %191 = vmatprep.subr.mxu0 0.0
  %192 = vmatpush1.msra.mxu0 0.0
  %193 = vmatprep.subr.mxu0 0.0
  %194 = vmatpush1.msra.mxu0 0.0
  %195 = vmatprep.subr.mxu0 0.0
  %196 = vmatpush1.msra.mxu0 0.0
  %197 = vmatprep.subr.mxu0 0.0
  %198 = vmatpush1.msra.mxu0 0.0
  %199 = vmatprep.subr.mxu0 0.0
  %200 = vmatpush1.msra.mxu0 0.0
  %201 = vmatprep.subr.mxu0 0.0
  %202 = vmatpush1.msra.mxu0 0.0
  %203 = vmatprep.subr.mxu0 0.0
  %204 = vmatpush1.msra.mxu0 0.0
  %205 = vmatprep.subr.mxu0 0.0
  %206 = vmatpush1.msra.mxu0 0.0
  %207 = vmatprep.subr.mxu0 0.0
  %208 = vmatpush1.msra.mxu0 0.0
  %209 = vmatprep.subr.mxu0 0.0
  %210 = vmatpush1.msra.mxu0 0.0
  %211 = vmatprep.subr.mxu0 0.0
  %212 = vmatpush1.msra.mxu0 0.0
  %213 = vmatprep.subr.mxu0 0.0
  %214 = vmatpush1.msra.mxu0 0.0
  %215 = vmatprep.subr.mxu0 0.0
  %216 = vmatpush1.msra.mxu0 0.0
  %217 = vmatprep.subr.mxu0 0.0
  %218 = vmatpush1.msra.mxu0 0.0
  %219 = vmatprep.subr.mxu0 0.0
  %220 = vmatpush1.msra.mxu0 0.0
  %221 = vmatprep.subr.mxu0 0.0
  %222 = vmatpush1.msra.mxu0 0.0
  %223 = vmatprep.subr.mxu0 0.0
  %224 = vmatpush1.msra.mxu0 0.0
  %225 = vmatprep.subr.mxu0 0.0
  %226 = vmatpush1.msra.mxu0 0.0
  %227 = vmatprep.subr.mxu0 0.0
  %228 = vmatpush1.msra.mxu0 0.0
  %229 = vmatprep.subr.mxu0 0.0
  %230 = vmatpush1.msra.mxu0 0.0
  %231 = vmatprep.subr.mxu0 0.0
  %232 = vmatpush1.msra.mxu0 0.0
  %233 = vmatprep.subr.mxu0 0.0
  %234 = vmatpush1.msra.mxu0 0.0
  %235 = vmatprep.subr.mxu0 0.0
  %236 = vmatpush1.msra.mxu0 0.0
  %237 = vmatprep.subr.mxu0 0.0
  %238 = vmatpush1.msra.mxu0 0.0
  %239 = vmatprep.mubr.f32.mxu0 0.0
  %240 = vmatmul.mubr.f32.gmra.mrb[0].mxu0 %v173
  %v241 = vpop.f32.mrb[0].mxu0
  %v242 = vadd.f32 %v169, %v241
  %v243 = vpop.f32.mrb[0].mxu0
  %244 = vdwg.mxu0
  %v245 = vadd.f32 %v142, %v242
  %v246 = vxor.u32 %v245, 2147483648
  %v247 = vmul.f32 %v246, 1.442695
  %v248 = vpow.pop %v247
  %v249 = vadd.f32 %v248, 1.0
  %v250 = vrcp.pop %v249
  %v251 = vmul.f32 1.0, %v250
  %253 = vrot.lane.b32.xlu0 %v242, 64
  %v254 = vpop.permute.xlu0 %253
  %v256 = vmul.f32 %v251, %v254
  %258 = vrot.lane.b32.xlu0 %v256, 64
  %v259 = vpop.permute.xlu0 %258
  %v261 = vadd.f32 %v142, %v259
  %v262 = vtanh.pop %v261
  %v263 = vsub.f32 1.0, %v251
  %265 = vrot.lane.b32.xlu0 %v262, 96
  %v266 = vpop.permute.xlu0 %265
  %v268 = vmul.f32 %v263, %v266
  %v269 = vmul.f32 %v251, 0.0
  %v270 = vadd.f32 %v268, %v269
  %272 = vrot.lane.b32.xlu0 %v270, 96
  %v273 = vpop.permute.xlu0 %272
  %v274 = vsel %vm171, %v273, 0
  %276 = vmatprep.subr.mxu0 0.0
  %277 = vmatpush1.msra.mxu0 %v160
  %278 = vmatprep.subr.mxu0 0.0
  %279 = vmatpush1.msra.mxu0 %v161
  %280 = vmatprep.subr.mxu0 0.0
  %281 = vmatpush1.msra.mxu0 %v162
  %282 = vmatprep.subr.mxu0 0.0
  %283 = vmatpush1.msra.mxu0 %v163
  %284 = vmatprep.subr.mxu0 0.0
  %285 = vmatpush1.msra.mxu0 0.0
  %286 = vmatprep.subr.mxu0 0.0
  %287 = vmatpush1.msra.mxu0 0.0
  %288 = vmatprep.subr.mxu0 0.0
  %289 = vmatpush1.msra.mxu0 0.0
  %290 = vmatprep.subr.mxu0 0.0
  %291 = vmatpush1.msra.mxu0 0.0
  %292 = vmatprep.subr.mxu0 0.0
  %293 = vmatpush1.msra.mxu0 0.0
  %294 = vmatprep.subr.mxu0 0.0
  %295 = vmatpush1.msra.mxu0 0.0
  %296 = vmatprep.subr.mxu0 0.0
  %297 = vmatpush1.msra.mxu0 0.0
  %298 = vmatprep.subr.mxu0 0.0
  %299 = vmatpush1.msra.mxu0 0.0
  %300 = vmatprep.subr.mxu0 0.0
  %301 = vmatpush1.msra.mxu0 0.0
  %302 = vmatprep.subr.mxu0 0.0
  %303 = vmatpush1.msra.mxu0 0.0
  %304 = vmatprep.subr.mxu0 0.0
  %305 = vmatpush1.msra.mxu0 0.0
  %306 = vmatprep.subr.mxu0 0.0
  %307 = vmatpush1.msra.mxu0 0.0
  %308 = vmatprep.subr.mxu0 0.0
  %309 = vmatpush1.msra.mxu0 0.0
  %310 = vmatprep.subr.mxu0 0.0
  %311 = vmatpush1.msra.mxu0 0.0
  %312 = vmatprep.subr.mxu0 0.0
  %313 = vmatpush1.msra.mxu0 0.0
  %314 = vmatprep.subr.mxu0 0.0
  %315 = vmatpush1.msra.mxu0 0.0
  %316 = vmatprep.subr.mxu0 0.0
  %317 = vmatpush1.msra.mxu0 0.0
  %318 = vmatprep.subr.mxu0 0.0
  %319 = vmatpush1.msra.mxu0 0.0
  %320 = vmatprep.subr.mxu0 0.0
  %321 = vmatpush1.msra.mxu0 0.0
  %322 = vmatprep.subr.mxu0 0.0
  %323 = vmatpush1.msra.mxu0 0.0
  %324 = vmatprep.subr.mxu0 0.0
  %325 = vmatpush1.msra.mxu0 0.0
  %326 = vmatprep.subr.mxu0 0.0
  %327 = vmatpush1.msra.mxu0 0.0
  %328 = vmatprep.subr.mxu0 0.0
  %329 = vmatpush1.msra.mxu0 0.0
  %330 = vmatprep.subr.mxu0 0.0
  %331 = vmatpush1.msra.mxu0 0.0
  %332 = vmatprep.subr.mxu0 0.0
  %333 = vmatpush1.msra.mxu0 0.0
  %334 = vmatprep.subr.mxu0 0.0
  %335 = vmatpush1.msra.mxu0 0.0
  %336 = vmatprep.subr.mxu0 0.0
  %337 = vmatpush1.msra.mxu0 0.0
  %338 = vmatprep.subr.mxu0 0.0
  %339 = vmatpush1.msra.mxu0 0.0
  %340 = vmatprep.mubr.f32.mxu0 0.0
  %341 = vmatmul.mubr.f32.gmra.mrb[0].mxu0 %v274
  %v342 = vpop.f32.mrb[0].mxu0
  %v343 = vadd.f32 %v169, %v342
  %v344 = vpop.f32.mrb[0].mxu0
  %345 = vdwg.mxu0
  %v347 = vrot.slane %v343, 4
  %v349 = vadd.f32 %v142, %v347
  %v350 = vxor.u32 %v349, 2147483648
  %v351 = vmul.f32 %v350, 1.442695
  %v352 = vpow.pop %v351
  %v353 = vadd.f32 %v352, 1.0
  %v354 = vrcp.pop %v353
  %v355 = vmul.f32 1.0, %v354
  %356 = vrot.lane.b32.xlu0 %v347, 64
  %v357 = vpop.permute.xlu0 %356
  %v359 = vmul.f32 %v355, %v357
  %361 = vrot.lane.b32.xlu0 %v359, 64
  %v362 = vpop.permute.xlu0 %361
  %v364 = vadd.f32 %v142, %v362
  %v365 = vtanh.pop %v364
  %v366 = vsub.f32 1.0, %v355
  %368 = vrot.lane.b32.xlu0 %v365, 96
  %v369 = vpop.permute.xlu0 %368
  %v371 = vmul.f32 %v366, %v369
  %v372 = vrot.slane %v270, 4
  %v374 = vmul.f32 %v355, %v372
  %v375 = vadd.f32 %v371, %v374
  %v377 = vrot.slane %v375, 4
  %378 = vrot.lane.b32.xlu0 %v377, 96
  %v379 = vpop.permute.xlu0 %378
  %v380 = vsel %vm171, %v379, 0
  %382 = vmatprep.subr.mxu0 0.0
  %383 = vmatpush1.msra.mxu0 %v160
  %384 = vmatprep.subr.mxu0 0.0
  %385 = vmatpush1.msra.mxu0 %v161
  %386 = vmatprep.subr.mxu0 0.0
  %387 = vmatpush1.msra.mxu0 %v162
  %388 = vmatprep.subr.mxu0 0.0
  %389 = vmatpush1.msra.mxu0 %v163
  %390 = vmatprep.subr.mxu0 0.0
  %391 = vmatpush1.msra.mxu0 0.0
  %392 = vmatprep.subr.mxu0 0.0
  %393 = vmatpush1.msra.mxu0 0.0
  %394 = vmatprep.subr.mxu0 0.0
  %395 = vmatpush1.msra.mxu0 0.0
  %396 = vmatprep.subr.mxu0 0.0
  %397 = vmatpush1.msra.mxu0 0.0
  %398 = vmatprep.subr.mxu0 0.0
  %399 = vmatpush1.msra.mxu0 0.0
  %400 = vmatprep.subr.mxu0 0.0
  %401 = vmatpush1.msra.mxu0 0.0
  %402 = vmatprep.subr.mxu0 0.0
  %403 = vmatpush1.msra.mxu0 0.0
  %404 = vmatprep.subr.mxu0 0.0
  %405 = vmatpush1.msra.mxu0 0.0
  %406 = vmatprep.subr.mxu0 0.0
  %407 = vmatpush1.msra.mxu0 0.0
  %408 = vmatprep.subr.mxu0 0.0
  %409 = vmatpush1.msra.mxu0 0.0
  %410 = vmatprep.subr.mxu0 0.0
  %411 = vmatpush1.msra.mxu0 0.0
  %412 = vmatprep.subr.mxu0 0.0
  %413 = vmatpush1.msra.mxu0 0.0
  %414 = vmatprep.subr.mxu0 0.0
  %415 = vmatpush1.msra.mxu0 0.0
  %416 = vmatprep.subr.mxu0 0.0
  %417 = vmatpush1.msra.mxu0 0.0
  %418 = vmatprep.subr.mxu0 0.0
  %419 = vmatpush1.msra.mxu0 0.0
  %420 = vmatprep.subr.mxu0 0.0
  %421 = vmatpush1.msra.mxu0 0.0
  %422 = vmatprep.subr.mxu0 0.0
  %423 = vmatpush1.msra.mxu0 0.0
  %424 = vmatprep.subr.mxu0 0.0
  %425 = vmatpush1.msra.mxu0 0.0
  %426 = vmatprep.subr.mxu0 0.0
  %427 = vmatpush1.msra.mxu0 0.0
  %428 = vmatprep.subr.mxu0 0.0
  %429 = vmatpush1.msra.mxu0 0.0
  %430 = vmatprep.subr.mxu0 0.0
  %431 = vmatpush1.msra.mxu0 0.0
  %432 = vmatprep.subr.mxu0 0.0
  %433 = vmatpush1.msra.mxu0 0.0
  %434 = vmatprep.subr.mxu0 0.0
  %435 = vmatpush1.msra.mxu0 0.0
  %436 = vmatprep.subr.mxu0 0.0
  %437 = vmatpush1.msra.mxu0 0.0
  %438 = vmatprep.subr.mxu0 0.0
  %439 = vmatpush1.msra.mxu0 0.0
  %440 = vmatprep.subr.mxu0 0.0
  %441 = vmatpush1.msra.mxu0 0.0
  %442 = vmatprep.subr.mxu0 0.0
  %443 = vmatpush1.msra.mxu0 0.0
  %444 = vmatprep.subr.mxu0 0.0
  %445 = vmatpush1.msra.mxu0 0.0
  %446 = vmatprep.mubr.f32.mxu0 0.0
  %447 = vmatmul.mubr.f32.gmra.mrb[0].mxu0 %v380
  %v448 = vpop.f32.mrb[0].mxu0
  %v449 = vadd.f32 %v169, %v448
  %v450 = vpop.f32.mrb[0].mxu0
  %451 = vdwg.mxu0
  %v452 = vadd.f32 %v147, %v449
  %v453 = vxor.u32 %v452, 2147483648
  %v454 = vmul.f32 %v453, 1.442695
  %v455 = vpow.pop %v454
  %v456 = vadd.f32 %v455, 1.0
  %v457 = vrcp.pop %v456
  %v458 = vmul.f32 1.0, %v457
  %460 = vrot.lane.b32.xlu0 %v449, 64
  %v461 = vpop.permute.xlu0 %460
  %v463 = vmul.f32 %v458, %v461
  %465 = vrot.lane.b32.xlu0 %v463, 64
  %v466 = vpop.permute.xlu0 %465
  %v468 = vadd.f32 %v147, %v466
  %v469 = vtanh.pop %v468
  %v470 = vsub.f32 1.0, %v458
  %472 = vrot.lane.b32.xlu0 %v469, 96
  %v473 = vpop.permute.xlu0 %472
  %v475 = vmul.f32 %v470, %v473
  %v477 = vmul.f32 %v458, %v377
  %v478 = vadd.f32 %v475, %v477
  %480 = vrot.lane.b32.xlu0 %v478, 96
  %v481 = vpop.permute.xlu0 %480
  %v482 = vsel %vm171, %v481, 0
  %484 = vmatprep.subr.mxu0 0.0
  %485 = vmatpush1.msra.mxu0 %v160
  %486 = vmatprep.subr.mxu0 0.0
  %487 = vmatpush1.msra.mxu0 %v161
  %488 = vmatprep.subr.mxu0 0.0
  %489 = vmatpush1.msra.mxu0 %v162
  %490 = vmatprep.subr.mxu0 0.0
  %491 = vmatpush1.msra.mxu0 %v163
  %492 = vmatprep.subr.mxu0 0.0
  %493 = vmatpush1.msra.mxu0 0.0
  %494 = vmatprep.subr.mxu0 0.0
  %495 = vmatpush1.msra.mxu0 0.0
  %496 = vmatprep.subr.mxu0 0.0
  %497 = vmatpush1.msra.mxu0 0.0
  %498 = vmatprep.subr.mxu0 0.0
  %499 = vmatpush1.msra.mxu0 0.0
  %500 = vmatprep.subr.mxu0 0.0
  %501 = vmatpush1.msra.mxu0 0.0
  %502 = vmatprep.subr.mxu0 0.0
  %503 = vmatpush1.msra.mxu0 0.0
  %504 = vmatprep.subr.mxu0 0.0
  %505 = vmatpush1.msra.mxu0 0.0
  %506 = vmatprep.subr.mxu0 0.0
  %507 = vmatpush1.msra.mxu0 0.0
  %508 = vmatprep.subr.mxu0 0.0
  %509 = vmatpush1.msra.mxu0 0.0
  %510 = vmatprep.subr.mxu0 0.0
  %511 = vmatpush1.msra.mxu0 0.0
  %512 = vmatprep.subr.mxu0 0.0
  %513 = vmatpush1.msra.mxu0 0.0
  %514 = vmatprep.subr.mxu0 0.0
  %515 = vmatpush1.msra.mxu0 0.0
  %516 = vmatprep.subr.mxu0 0.0
  %517 = vmatpush1.msra.mxu0 0.0
  %518 = vmatprep.subr.mxu0 0.0
  %519 = vmatpush1.msra.mxu0 0.0
  %520 = vmatprep.subr.mxu0 0.0
  %521 = vmatpush1.msra.mxu0 0.0
  %522 = vmatprep.subr.mxu0 0.0
  %523 = vmatpush1.msra.mxu0 0.0
  %524 = vmatprep.subr.mxu0 0.0
  %525 = vmatpush1.msra.mxu0 0.0
  %526 = vmatprep.subr.mxu0 0.0
  %527 = vmatpush1.msra.mxu0 0.0
  %528 = vmatprep.subr.mxu0 0.0
  %529 = vmatpush1.msra.mxu0 0.0
  %530 = vmatprep.subr.mxu0 0.0
  %531 = vmatpush1.msra.mxu0 0.0
  %532 = vmatprep.subr.mxu0 0.0
  %533 = vmatpush1.msra.mxu0 0.0
  %534 = vmatprep.subr.mxu0 0.0
  %535 = vmatpush1.msra.mxu0 0.0
  %536 = vmatprep.subr.mxu0 0.0
  %537 = vmatpush1.msra.mxu0 0.0
  %538 = vmatprep.subr.mxu0 0.0
  %539 = vmatpush1.msra.mxu0 0.0
  %540 = vmatprep.subr.mxu0 0.0
  %541 = vmatpush1.msra.mxu0 0.0
  %542 = vmatprep.subr.mxu0 0.0
  %543 = vmatpush1.msra.mxu0 0.0
  %544 = vmatprep.subr.mxu0 0.0
  %545 = vmatpush1.msra.mxu0 0.0
  %546 = vmatprep.subr.mxu0 0.0
  %547 = vmatpush1.msra.mxu0 0.0
  %548 = vmatprep.mubr.f32.mxu0 0.0
  %549 = vmatmul.mubr.f32.gmra.mrb[0].mxu0 %v482
  %v550 = vpop.f32.mrb[0].mxu0
  %v551 = vadd.f32 %v169, %v550
  %v552 = vpop.f32.mrb[0].mxu0
  %553 = vdwg.mxu0
  %v555 = vrot.slane %v551, 4
  %v557 = vadd.f32 %v147, %v555
  %v558 = vxor.u32 %v557, 2147483648
  %v559 = vmul.f32 %v558, 1.442695
  %v560 = vpow.pop %v559
  %v561 = vadd.f32 %v560, 1.0
  %v562 = vrcp.pop %v561
  %v563 = vmul.f32 1.0, %v562
  %564 = vrot.lane.b32.xlu0 %v555, 64
  %v565 = vpop.permute.xlu0 %564
  %v567 = vmul.f32 %v563, %v565
  %569 = vrot.lane.b32.xlu0 %v567, 64
  %v570 = vpop.permute.xlu0 %569
  %v572 = vadd.f32 %v147, %v570
  %v573 = vtanh.pop %v572
  %v574 = vsub.f32 1.0, %v563
  %576 = vrot.lane.b32.xlu0 %v573, 96
  %v577 = vpop.permute.xlu0 %576
  %v579 = vmul.f32 %v574, %v577
  %v580 = vrot.slane %v478, 4
  %v582 = vmul.f32 %v563, %v580
  %v583 = vadd.f32 %v579, %v582
  %v585 = vrot.slane %v583, 4
  %586 = vrot.lane.b32.xlu0 %v585, 96
  %v587 = vpop.permute.xlu0 %586
  %v588 = vsel %vm171, %v587, 0
  %590 = vmatprep.subr.mxu0 0.0
  %591 = vmatpush1.msra.mxu0 %v160
  %592 = vmatprep.subr.mxu0 0.0
  %593 = vmatpush1.msra.mxu0 %v161
  %594 = vmatprep.subr.mxu0 0.0
  %595 = vmatpush1.msra.mxu0 %v162
  %596 = vmatprep.subr.mxu0 0.0
  %597 = vmatpush1.msra.mxu0 %v163
  %598 = vmatprep.subr.mxu0 0.0
  %599 = vmatpush1.msra.mxu0 0.0
  %600 = vmatprep.subr.mxu0 0.0
  %601 = vmatpush1.msra.mxu0 0.0
  %602 = vmatprep.subr.mxu0 0.0
  %603 = vmatpush1.msra.mxu0 0.0
  %604 = vmatprep.subr.mxu0 0.0
  %605 = vmatpush1.msra.mxu0 0.0
  %606 = vmatprep.subr.mxu0 0.0
  %607 = vmatpush1.msra.mxu0 0.0
  %608 = vmatprep.subr.mxu0 0.0
  %609 = vmatpush1.msra.mxu0 0.0
  %610 = vmatprep.subr.mxu0 0.0
  %611 = vmatpush1.msra.mxu0 0.0
  %612 = vmatprep.subr.mxu0 0.0
  %613 = vmatpush1.msra.mxu0 0.0
  %614 = vmatprep.subr.mxu0 0.0
  %615 = vmatpush1.msra.mxu0 0.0
  %616 = vmatprep.subr.mxu0 0.0
  %617 = vmatpush1.msra.mxu0 0.0
  %618 = vmatprep.subr.mxu0 0.0
  %619 = vmatpush1.msra.mxu0 0.0
  %620 = vmatprep.subr.mxu0 0.0
  %621 = vmatpush1.msra.mxu0 0.0
  %622 = vmatprep.subr.mxu0 0.0
  %623 = vmatpush1.msra.mxu0 0.0
  %624 = vmatprep.subr.mxu0 0.0
  %625 = vmatpush1.msra.mxu0 0.0
  %626 = vmatprep.subr.mxu0 0.0
  %627 = vmatpush1.msra.mxu0 0.0
  %628 = vmatprep.subr.mxu0 0.0
  %629 = vmatpush1.msra.mxu0 0.0
  %630 = vmatprep.subr.mxu0 0.0
  %631 = vmatpush1.msra.mxu0 0.0
  %632 = vmatprep.subr.mxu0 0.0
  %633 = vmatpush1.msra.mxu0 0.0
  %634 = vmatprep.subr.mxu0 0.0
  %635 = vmatpush1.msra.mxu0 0.0
  %636 = vmatprep.subr.mxu0 0.0
  %637 = vmatpush1.msra.mxu0 0.0
  %638 = vmatprep.subr.mxu0 0.0
  %639 = vmatpush1.msra.mxu0 0.0
  %640 = vmatprep.subr.mxu0 0.0
  %641 = vmatpush1.msra.mxu0 0.0
  %642 = vmatprep.subr.mxu0 0.0
  %643 = vmatpush1.msra.mxu0 0.0
  %644 = vmatprep.subr.mxu0 0.0
  %645 = vmatpush1.msra.mxu0 0.0
  %646 = vmatprep.subr.mxu0 0.0
  %647 = vmatpush1.msra.mxu0 0.0
  %648 = vmatprep.subr.mxu0 0.0
  %649 = vmatpush1.msra.mxu0 0.0
  %650 = vmatprep.subr.mxu0 0.0
  %651 = vmatpush1.msra.mxu0 0.0
  %652 = vmatprep.subr.mxu0 0.0
  %653 = vmatpush1.msra.mxu0 0.0
  %654 = vmatprep.mubr.f32.mxu0 0.0
  %655 = vmatmul.mubr.f32.gmra.mrb[0].mxu0 %v588
  %v656 = vpop.f32.mrb[0].mxu0
  %v657 = vadd.f32 %v169, %v656
  %v658 = vpop.f32.mrb[0].mxu0
  %659 = vdwg.mxu0
  %v660 = vadd.f32 %v152, %v657
  %v661 = vxor.u32 %v660, 2147483648
  %v662 = vmul.f32 %v661, 1.442695
  %v663 = vpow.pop %v662
  %v664 = vadd.f32 %v663, 1.0
  %v665 = vrcp.pop %v664
  %v666 = vmul.f32 1.0, %v665
  %668 = vrot.lane.b32.xlu0 %v657, 64
  %v669 = vpop.permute.xlu0 %668
  %v671 = vmul.f32 %v666, %v669
  %673 = vrot.lane.b32.xlu0 %v671, 64
  %v674 = vpop.permute.xlu0 %673
  %v676 = vadd.f32 %v152, %v674
  %v677 = vtanh.pop %v676
  %v678 = vsub.f32 1.0, %v666
  %680 = vrot.lane.b32.xlu0 %v677, 96
  %v681 = vpop.permute.xlu0 %680
  %v683 = vmul.f32 %v678, %v681
  %v685 = vmul.f32 %v666, %v585
  %v686 = vadd.f32 %v683, %v685
  %688 = vrot.lane.b32.xlu0 %v686, 96
  %v689 = vpop.permute.xlu0 %688
  %v690 = vsel %vm171, %v689, 0
  %692 = vmatprep.subr.mxu0 0.0
  %693 = vmatpush1.msra.mxu0 %v160
  %694 = vmatprep.subr.mxu0 0.0
  %695 = vmatpush1.msra.mxu0 %v161
  %696 = vmatprep.subr.mxu0 0.0
  %697 = vmatpush1.msra.mxu0 %v162
  %698 = vmatprep.subr.mxu0 0.0
  %699 = vmatpush1.msra.mxu0 %v163
  %700 = vmatprep.subr.mxu0 0.0
  %701 = vmatpush1.msra.mxu0 0.0
  %702 = vmatprep.subr.mxu0 0.0
  %703 = vmatpush1.msra.mxu0 0.0
  %704 = vmatprep.subr.mxu0 0.0
  %705 = vmatpush1.msra.mxu0 0.0
  %706 = vmatprep.subr.mxu0 0.0
  %707 = vmatpush1.msra.mxu0 0.0
  %708 = vmatprep.subr.mxu0 0.0
  %709 = vmatpush1.msra.mxu0 0.0
  %710 = vmatprep.subr.mxu0 0.0
  %711 = vmatpush1.msra.mxu0 0.0
  %712 = vmatprep.subr.mxu0 0.0
  %713 = vmatpush1.msra.mxu0 0.0
  %714 = vmatprep.subr.mxu0 0.0
  %715 = vmatpush1.msra.mxu0 0.0
  %716 = vmatprep.subr.mxu0 0.0
  %717 = vmatpush1.msra.mxu0 0.0
  %718 = vmatprep.subr.mxu0 0.0
  %719 = vmatpush1.msra.mxu0 0.0
  %720 = vmatprep.subr.mxu0 0.0
  %721 = vmatpush1.msra.mxu0 0.0
  %722 = vmatprep.subr.mxu0 0.0
  %723 = vmatpush1.msra.mxu0 0.0
  %724 = vmatprep.subr.mxu0 0.0
  %725 = vmatpush1.msra.mxu0 0.0
  %726 = vmatprep.subr.mxu0 0.0
  %727 = vmatpush1.msra.mxu0 0.0
  %728 = vmatprep.subr.mxu0 0.0
  %729 = vmatpush1.msra.mxu0 0.0
  %730 = vmatprep.subr.mxu0 0.0
  %731 = vmatpush1.msra.mxu0 0.0
  %732 = vmatprep.subr.mxu0 0.0
  %733 = vmatpush1.msra.mxu0 0.0
  %734 = vmatprep.subr.mxu0 0.0
  %735 = vmatpush1.msra.mxu0 0.0
  %736 = vmatprep.subr.mxu0 0.0
  %737 = vmatpush1.msra.mxu0 0.0
  %738 = vmatprep.subr.mxu0 0.0
  %739 = vmatpush1.msra.mxu0 0.0
  %740 = vmatprep.subr.mxu0 0.0
  %741 = vmatpush1.msra.mxu0 0.0
  %742 = vmatprep.subr.mxu0 0.0
  %743 = vmatpush1.msra.mxu0 0.0
  %744 = vmatprep.subr.mxu0 0.0
  %745 = vmatpush1.msra.mxu0 0.0
  %746 = vmatprep.subr.mxu0 0.0
  %747 = vmatpush1.msra.mxu0 0.0
  %748 = vmatprep.subr.mxu0 0.0
  %749 = vmatpush1.msra.mxu0 0.0
  %750 = vmatprep.subr.mxu0 0.0
  %751 = vmatpush1.msra.mxu0 0.0
  %752 = vmatprep.subr.mxu0 0.0
  %753 = vmatpush1.msra.mxu0 0.0
  %754 = vmatprep.subr.mxu0 0.0
  %755 = vmatpush1.msra.mxu0 0.0
  %756 = vmatprep.mubr.f32.mxu0 0.0
  %757 = vmatmul.mubr.f32.gmra.mrb[0].mxu0 %v690
  %v758 = vpop.f32.mrb[0].mxu0
  %v759 = vadd.f32 %v169, %v758
  %v760 = vpop.f32.mrb[0].mxu0
  %761 = vdwg.mxu0
  %v763 = vrot.slane %v759, 4
  %v765 = vadd.f32 %v152, %v763
  %v766 = vxor.u32 %v765, 2147483648
  %v767 = vmul.f32 %v766, 1.442695
  %v768 = vpow.pop %v767
  %v769 = vadd.f32 %v768, 1.0
  %v770 = vrcp.pop %v769
  %v771 = vmul.f32 1.0, %v770
  %772 = vrot.lane.b32.xlu0 %v763, 64
  %v773 = vpop.permute.xlu0 %772
  %v775 = vmul.f32 %v771, %v773
  %777 = vrot.lane.b32.xlu0 %v775, 64
  %v778 = vpop.permute.xlu0 %777
  %v780 = vadd.f32 %v152, %v778
  %v781 = vtanh.pop %v780
  %v782 = vsub.f32 1.0, %v771
  %784 = vrot.lane.b32.xlu0 %v781, 96
  %v785 = vpop.permute.xlu0 %784
  %v787 = vmul.f32 %v782, %v785
  %v788 = vrot.slane %v686, 4
  %v790 = vmul.f32 %v771, %v788
  %v791 = vadd.f32 %v787, %v790
  %v793 = vrot.slane %v791, 4
  %794 = vrot.lane.b32.xlu0 %v793, 96
  %v795 = vpop.permute.xlu0 %794
  %v796 = vsel %vm171, %v795, 0
  %798 = vmatprep.subr.mxu0 0.0
  %799 = vmatpush1.msra.mxu0 %v160
  %800 = vmatprep.subr.mxu0 0.0
  %801 = vmatpush1.msra.mxu0 %v161
  %802 = vmatprep.subr.mxu0 0.0
  %803 = vmatpush1.msra.mxu0 %v162
  %804 = vmatprep.subr.mxu0 0.0
  %805 = vmatpush1.msra.mxu0 %v163
  %806 = vmatprep.subr.mxu0 0.0
  %807 = vmatpush1.msra.mxu0 0.0
  %808 = vmatprep.subr.mxu0 0.0
  %809 = vmatpush1.msra.mxu0 0.0
  %810 = vmatprep.subr.mxu0 0.0
  %811 = vmatpush1.msra.mxu0 0.0
  %812 = vmatprep.subr.mxu0 0.0
  %813 = vmatpush1.msra.mxu0 0.0
  %814 = vmatprep.subr.mxu0 0.0
  %815 = vmatpush1.msra.mxu0 0.0
  %816 = vmatprep.subr.mxu0 0.0
  %817 = vmatpush1.msra.mxu0 0.0
  %818 = vmatprep.subr.mxu0 0.0
  %819 = vmatpush1.msra.mxu0 0.0
  %820 = vmatprep.subr.mxu0 0.0
  %821 = vmatpush1.msra.mxu0 0.0
  %822 = vmatprep.subr.mxu0 0.0
  %823 = vmatpush1.msra.mxu0 0.0
  %824 = vmatprep.subr.mxu0 0.0
  %825 = vmatpush1.msra.mxu0 0.0
  %826 = vmatprep.subr.mxu0 0.0
  %827 = vmatpush1.msra.mxu0 0.0
  %828 = vmatprep.subr.mxu0 0.0
  %829 = vmatpush1.msra.mxu0 0.0
  %830 = vmatprep.subr.mxu0 0.0
  %831 = vmatpush1.msra.mxu0 0.0
  %832 = vmatprep.subr.mxu0 0.0
  %833 = vmatpush1.msra.mxu0 0.0
  %834 = vmatprep.subr.mxu0 0.0
  %835 = vmatpush1.msra.mxu0 0.0
  %836 = vmatprep.subr.mxu0 0.0
  %837 = vmatpush1.msra.mxu0 0.0
  %838 = vmatprep.subr.mxu0 0.0
  %839 = vmatpush1.msra.mxu0 0.0
  %840 = vmatprep.subr.mxu0 0.0
  %841 = vmatpush1.msra.mxu0 0.0
  %842 = vmatprep.subr.mxu0 0.0
  %843 = vmatpush1.msra.mxu0 0.0
  %844 = vmatprep.subr.mxu0 0.0
  %845 = vmatpush1.msra.mxu0 0.0
  %846 = vmatprep.subr.mxu0 0.0
  %847 = vmatpush1.msra.mxu0 0.0
  %848 = vmatprep.subr.mxu0 0.0
  %849 = vmatpush1.msra.mxu0 0.0
  %850 = vmatprep.subr.mxu0 0.0
  %851 = vmatpush1.msra.mxu0 0.0
  %852 = vmatprep.subr.mxu0 0.0
  %853 = vmatpush1.msra.mxu0 0.0
  %854 = vmatprep.subr.mxu0 0.0
  %855 = vmatpush1.msra.mxu0 0.0
  %856 = vmatprep.subr.mxu0 0.0
  %857 = vmatpush1.msra.mxu0 0.0
  %858 = vmatprep.subr.mxu0 0.0
  %859 = vmatpush1.msra.mxu0 0.0
  %860 = vmatprep.subr.mxu0 0.0
  %861 = vmatpush1.msra.mxu0 0.0
  %862 = vmatprep.mubr.f32.mxu0 0.0
  %863 = vmatmul.mubr.f32.gmra.mrb[0].mxu0 %v796
  %v864 = vpop.f32.mrb[0].mxu0
  %v865 = vadd.f32 %v169, %v864
  %v866 = vpop.f32.mrb[0].mxu0
  %867 = vdwg.mxu0
  %v868 = vadd.f32 %v157, %v865
  %v869 = vxor.u32 %v868, 2147483648
  %v870 = vmul.f32 %v869, 1.442695
  %v871 = vpow.pop %v870
  %v872 = vadd.f32 %v871, 1.0
  %v873 = vrcp.pop %v872
  %v874 = vmul.f32 1.0, %v873
  %876 = vrot.lane.b32.xlu0 %v865, 64
  %v877 = vpop.permute.xlu0 %876
  %v879 = vmul.f32 %v874, %v877
  %881 = vrot.lane.b32.xlu0 %v879, 64
  %v882 = vpop.permute.xlu0 %881
  %v884 = vadd.f32 %v157, %v882
  %v885 = vtanh.pop %v884
  %v886 = vsub.f32 1.0, %v874
  %888 = vrot.lane.b32.xlu0 %v885, 96
  %v889 = vpop.permute.xlu0 %888
  %v891 = vmul.f32 %v886, %v889
  %v893 = vmul.f32 %v874, %v793
  %v894 = vadd.f32 %v891, %v893
  %896 = vrot.lane.b32.xlu0 %v894, 96
  %v897 = vpop.permute.xlu0 %896
  %v898 = vsel %vm171, %v897, 0
  %900 = vmatprep.subr.mxu0 0.0
  %901 = vmatpush1.msra.mxu0 %v160
  %902 = vmatprep.subr.mxu0 0.0
  %903 = vmatpush1.msra.mxu0 %v161
  %904 = vmatprep.subr.mxu0 0.0
  %905 = vmatpush1.msra.mxu0 %v162
  %906 = vmatprep.subr.mxu0 0.0
  %907 = vmatpush1.msra.mxu0 %v163
  %908 = vmatprep.subr.mxu0 0.0
  %909 = vmatpush1.msra.mxu0 0.0
  %910 = vmatprep.subr.mxu0 0.0
  %911 = vmatpush1.msra.mxu0 0.0
  %912 = vmatprep.subr.mxu0 0.0
  %913 = vmatpush1.msra.mxu0 0.0
  %914 = vmatprep.subr.mxu0 0.0
  %915 = vmatpush1.msra.mxu0 0.0
  %916 = vmatprep.subr.mxu0 0.0
  %917 = vmatpush1.msra.mxu0 0.0
  %918 = vmatprep.subr.mxu0 0.0
  %919 = vmatpush1.msra.mxu0 0.0
  %920 = vmatprep.subr.mxu0 0.0
  %921 = vmatpush1.msra.mxu0 0.0
  %922 = vmatprep.subr.mxu0 0.0
  %923 = vmatpush1.msra.mxu0 0.0
  %924 = vmatprep.subr.mxu0 0.0
  %925 = vmatpush1.msra.mxu0 0.0
  %926 = vmatprep.subr.mxu0 0.0
  %927 = vmatpush1.msra.mxu0 0.0
  %928 = vmatprep.subr.mxu0 0.0
  %929 = vmatpush1.msra.mxu0 0.0
  %930 = vmatprep.subr.mxu0 0.0
  %931 = vmatpush1.msra.mxu0 0.0
  %932 = vmatprep.subr.mxu0 0.0
  %933 = vmatpush1.msra.mxu0 0.0
  %934 = vmatprep.subr.mxu0 0.0
  %935 = vmatpush1.msra.mxu0 0.0
  %936 = vmatprep.subr.mxu0 0.0
  %937 = vmatpush1.msra.mxu0 0.0
  %938 = vmatprep.subr.mxu0 0.0
  %939 = vmatpush1.msra.mxu0 0.0
  %940 = vmatprep.subr.mxu0 0.0
  %941 = vmatpush1.msra.mxu0 0.0
  %942 = vmatprep.subr.mxu0 0.0
  %943 = vmatpush1.msra.mxu0 0.0
  %944 = vmatprep.subr.mxu0 0.0
  %945 = vmatpush1.msra.mxu0 0.0
  %946 = vmatprep.subr.mxu0 0.0
  %947 = vmatpush1.msra.mxu0 0.0
  %948 = vmatprep.subr.mxu0 0.0
  %949 = vmatpush1.msra.mxu0 0.0
  %950 = vmatprep.subr.mxu0 0.0
  %951 = vmatpush1.msra.mxu0 0.0
  %952 = vmatprep.subr.mxu0 0.0
  %953 = vmatpush1.msra.mxu0 0.0
  %954 = vmatprep.subr.mxu0 0.0
  %955 = vmatpush1.msra.mxu0 0.0
  %956 = vmatprep.subr.mxu0 0.0
  %957 = vmatpush1.msra.mxu0 0.0
  %958 = vmatprep.subr.mxu0 0.0
  %959 = vmatpush1.msra.mxu0 0.0
  %960 = vmatprep.subr.mxu0 0.0
  %961 = vmatpush1.msra.mxu0 0.0
  %962 = vmatprep.subr.mxu0 0.0
  %963 = vmatpush1.msra.mxu0 0.0
  %964 = vmatprep.mubr.f32.mxu0 0.0
  %965 = vmatmul.mubr.f32.gmra.mrb[0].mxu0 %v898
  %v966 = vpop.f32.mrb[0].mxu0
  %v967 = vadd.f32 %v169, %v966
  %v968 = vpop.f32.mrb[0].mxu0
  %969 = vdwg.mxu0
  %v971 = vrot.slane %v967, 4
  %v973 = vadd.f32 %v157, %v971
  %v974 = vxor.u32 %v973, 2147483648
  %v975 = vmul.f32 %v974, 1.442695
  %v976 = vpow.pop %v975
  %v977 = vadd.f32 %v976, 1.0
  %v978 = vrcp.pop %v977
  %v979 = vmul.f32 1.0, %v978
  %980 = vrot.lane.b32.xlu0 %v971, 64
  %v981 = vpop.permute.xlu0 %980
  %v983 = vmul.f32 %v979, %v981
  %985 = vrot.lane.b32.xlu0 %v983, 64
  %v986 = vpop.permute.xlu0 %985
  %v988 = vadd.f32 %v157, %v986
  %v989 = vtanh.pop %v988
  %v990 = vsub.f32 1.0, %v979
  %992 = vrot.lane.b32.xlu0 %v989, 96
  %v993 = vpop.permute.xlu0 %992
  %v995 = vmul.f32 %v990, %v993
  %v996 = vrot.slane %v894, 4
  %v998 = vmul.f32 %v979, %v996
  %v999 = vadd.f32 %v995, %v998
  %vm1000 = vcmask 1043456
  %v1001 = vsel %vm1000, %v270, %v375
  %v1002 = vsel %vm1000, %v478, %v583
  %v1003 = vsel %vm1000, %v686, %v791
  %v1004 = vsel %vm1000, %v894, %v999
  %v1005 = vld [vmem:[%s5] sm:$0xff]
  %v1006 = vld [vmem:[%s5 + $0x8] sm:$0xff]
  %v1007 = vld [vmem:[%s5 + $0x10] sm:$0xff]
  %v1008 = vld [vmem:[%s5 + $0x18] sm:$0xff]
  %v1009 = vld [vmem:[%s7] sm:$0x1]
  %v1011 = vlaneseq
  %v1012 = vshrl.u32 %v1011, 7
  %v1013 = vsub.s32 0, %v1012
  %v1014 = vrot.slane %v1009, %v1013
  %1020 = vrot.lane.b32.xlu0 %v1001, 96
  %v1021 = vpop.permute.xlu0 %1020
  %1022 = vrot.lane.b32.xlu0 %v1002, 96
  %v1023 = vpop.permute.xlu0 %1022
  %1024 = vrot.lane.b32.xlu0 %v1003, 96
  %v1025 = vpop.permute.xlu0 %1024
  %1026 = vrot.lane.b32.xlu0 %v1004, 96
  %v1027 = vpop.permute.xlu0 %1026
  %v1028 = vsel %vm171, %v1021, 0
  %v1030 = vsel %vm171, %v1023, 0
  %v1032 = vsel %vm171, %v1025, 0
  %v1034 = vsel %vm171, %v1027, 0
  %1036 = vmatprep.subr.mxu0 0.0
  %1037 = vmatpush1.msra.mxu0 %v1005
  %1038 = vmatprep.subr.mxu0 0.0
  %1039 = vmatpush1.msra.mxu0 %v1006
  %1040 = vmatprep.subr.mxu0 0.0
  %1041 = vmatpush1.msra.mxu0 %v1007
  %1042 = vmatprep.subr.mxu0 0.0
  %1043 = vmatpush1.msra.mxu0 %v1008
  %1044 = vmatprep.subr.mxu0 0.0
  %1045 = vmatpush1.msra.mxu0 0.0
  %1046 = vmatprep.subr.mxu0 0.0
  %1047 = vmatpush1.msra.mxu0 0.0
  %1048 = vmatprep.subr.mxu0 0.0
  %1049 = vmatpush1.msra.mxu0 0.0
  %1050 = vmatprep.subr.mxu0 0.0
  %1051 = vmatpush1.msra.mxu0 0.0
  %1052 = vmatprep.subr.mxu0 0.0
  %1053 = vmatpush1.msra.mxu0 0.0
  %1054 = vmatprep.subr.mxu0 0.0
  %1055 = vmatpush1.msra.mxu0 0.0
  %1056 = vmatprep.subr.mxu0 0.0
  %1057 = vmatpush1.msra.mxu0 0.0
  %1058 = vmatprep.subr.mxu0 0.0
  %1059 = vmatpush1.msra.mxu0 0.0
  %1060 = vmatprep.subr.mxu0 0.0
  %1061 = vmatpush1.msra.mxu0 0.0
  %1062 = vmatprep.subr.mxu0 0.0
  %1063 = vmatpush1.msra.mxu0 0.0
  %1064 = vmatprep.subr.mxu0 0.0
  %1065 = vmatpush1.msra.mxu0 0.0
  %1066 = vmatprep.subr.mxu0 0.0
  %1067 = vmatpush1.msra.mxu0 0.0
  %1068 = vmatprep.subr.mxu0 0.0
  %1069 = vmatpush1.msra.mxu0 0.0
  %1070 = vmatprep.subr.mxu0 0.0
  %1071 = vmatpush1.msra.mxu0 0.0
  %1072 = vmatprep.subr.mxu0 0.0
  %1073 = vmatpush1.msra.mxu0 0.0
  %1074 = vmatprep.subr.mxu0 0.0
  %1075 = vmatpush1.msra.mxu0 0.0
  %1076 = vmatprep.subr.mxu0 0.0
  %1077 = vmatpush1.msra.mxu0 0.0
  %1078 = vmatprep.subr.mxu0 0.0
  %1079 = vmatpush1.msra.mxu0 0.0
  %1080 = vmatprep.subr.mxu0 0.0
  %1081 = vmatpush1.msra.mxu0 0.0
  %1082 = vmatprep.subr.mxu0 0.0
  %1083 = vmatpush1.msra.mxu0 0.0
  %1084 = vmatprep.subr.mxu0 0.0
  %1085 = vmatpush1.msra.mxu0 0.0
  %1086 = vmatprep.subr.mxu0 0.0
  %1087 = vmatpush1.msra.mxu0 0.0
  %1088 = vmatprep.subr.mxu0 0.0
  %1089 = vmatpush1.msra.mxu0 0.0
  %1090 = vmatprep.subr.mxu0 0.0
  %1091 = vmatpush1.msra.mxu0 0.0
  %1092 = vmatprep.subr.mxu0 0.0
  %1093 = vmatpush1.msra.mxu0 0.0
  %1094 = vmatprep.subr.mxu0 0.0
  %1095 = vmatpush1.msra.mxu0 0.0
  %1096 = vmatprep.subr.mxu0 0.0
  %1097 = vmatpush1.msra.mxu0 0.0
  %1098 = vmatprep.subr.mxu0 0.0
  %1099 = vmatpush1.msra.mxu0 0.0
  %1100 = vmatprep.mubr.f32.mxu0 0.0
  %1101 = vmatmul.mubr.f32.gmra.mrb[0].mxu0 %v1028
  %v1102 = vpop.f32.mrb[0].mxu0
  %v1103 = vadd.f32 %v1014, %v1102
  %v1104 = vpop.f32.mrb[0].mxu0
  %1105 = vmatprep.mubr.f32.mxu0 0.0
  %1106 = vmatmul.mubr.f32.gmra.mrb[0].mxu0 %v1030
  %v1107 = vpop.f32.mrb[0].mxu0
  %v1108 = vadd.f32 %v1014, %v1107
  %v1109 = vpop.f32.mrb[0].mxu0
  %1110 = vmatprep.mubr.f32.mxu0 0.0
  %1111 = vmatmul.mubr.f32.gmra.mrb[0].mxu0 %v1032
  %v1112 = vpop.f32.mrb[0].mxu0
  %v1113 = vadd.f32 %v1014, %v1112
  %v1114 = vpop.f32.mrb[0].mxu0
  %1115 = vmatprep.mubr.f32.mxu0 0.0
  %1116 = vmatmul.mubr.f32.gmra.mrb[0].mxu0 %v1034
  %v1117 = vpop.f32.mrb[0].mxu0
  %v1118 = vadd.f32 %v1014, %v1117
  %v1119 = vpop.f32.mrb[0].mxu0
  %1120 = vdwg.mxu0
  %v1121 = vld [vmem:[%s6] sm:$0xff]
  %v1122 = vld [vmem:[%s6 + $0x8] sm:$0xff]
  %v1123 = vld [vmem:[%s6 + $0x10] sm:$0xff]
  %v1124 = vld [vmem:[%s6 + $0x18] sm:$0xff]
  %v1125 = vld [vmem:[%s8] sm:$0x1]
  %v1127 = vlaneseq
  %v1128 = vshrl.u32 %v1127, 7
  %v1129 = vsub.s32 0, %v1128
  %v1130 = vrot.slane %v1125, %v1129
  %1132 = vmatprep.subr.mxu0 0.0
  %1133 = vmatpush1.msra.mxu0 %v1121
  %1134 = vmatprep.subr.mxu0 0.0
  %1135 = vmatpush1.msra.mxu0 %v1122
  %1136 = vmatprep.subr.mxu0 0.0
  %1137 = vmatpush1.msra.mxu0 %v1123
  %1138 = vmatprep.subr.mxu0 0.0
  %1139 = vmatpush1.msra.mxu0 %v1124
  %1140 = vmatprep.subr.mxu0 0.0
  %1141 = vmatpush1.msra.mxu0 0.0
  %1142 = vmatprep.subr.mxu0 0.0
  %1143 = vmatpush1.msra.mxu0 0.0
  %1144 = vmatprep.subr.mxu0 0.0
  %1145 = vmatpush1.msra.mxu0 0.0
  %1146 = vmatprep.subr.mxu0 0.0
  %1147 = vmatpush1.msra.mxu0 0.0
  %1148 = vmatprep.subr.mxu0 0.0
  %1149 = vmatpush1.msra.mxu0 0.0
  %1150 = vmatprep.subr.mxu0 0.0
  %1151 = vmatpush1.msra.mxu0 0.0
  %1152 = vmatprep.subr.mxu0 0.0
  %1153 = vmatpush1.msra.mxu0 0.0
  %1154 = vmatprep.subr.mxu0 0.0
  %1155 = vmatpush1.msra.mxu0 0.0
  %1156 = vmatprep.subr.mxu0 0.0
  %1157 = vmatpush1.msra.mxu0 0.0
  %1158 = vmatprep.subr.mxu0 0.0
  %1159 = vmatpush1.msra.mxu0 0.0
  %1160 = vmatprep.subr.mxu0 0.0
  %1161 = vmatpush1.msra.mxu0 0.0
  %1162 = vmatprep.subr.mxu0 0.0
  %1163 = vmatpush1.msra.mxu0 0.0
  %1164 = vmatprep.subr.mxu0 0.0
  %1165 = vmatpush1.msra.mxu0 0.0
  %1166 = vmatprep.subr.mxu0 0.0
  %1167 = vmatpush1.msra.mxu0 0.0
  %1168 = vmatprep.subr.mxu0 0.0
  %1169 = vmatpush1.msra.mxu0 0.0
  %1170 = vmatprep.subr.mxu0 0.0
  %1171 = vmatpush1.msra.mxu0 0.0
  %1172 = vmatprep.subr.mxu0 0.0
  %1173 = vmatpush1.msra.mxu0 0.0
  %1174 = vmatprep.subr.mxu0 0.0
  %1175 = vmatpush1.msra.mxu0 0.0
  %1176 = vmatprep.subr.mxu0 0.0
  %1177 = vmatpush1.msra.mxu0 0.0
  %1178 = vmatprep.subr.mxu0 0.0
  %1179 = vmatpush1.msra.mxu0 0.0
  %1180 = vmatprep.subr.mxu0 0.0
  %1181 = vmatpush1.msra.mxu0 0.0
  %1182 = vmatprep.subr.mxu0 0.0
  %1183 = vmatpush1.msra.mxu0 0.0
  %1184 = vmatprep.subr.mxu0 0.0
  %1185 = vmatpush1.msra.mxu0 0.0
  %1186 = vmatprep.subr.mxu0 0.0
  %1187 = vmatpush1.msra.mxu0 0.0
  %1188 = vmatprep.subr.mxu0 0.0
  %1189 = vmatpush1.msra.mxu0 0.0
  %1190 = vmatprep.subr.mxu0 0.0
  %1191 = vmatpush1.msra.mxu0 0.0
  %1192 = vmatprep.subr.mxu0 0.0
  %1193 = vmatpush1.msra.mxu0 0.0
  %1194 = vmatprep.subr.mxu0 0.0
  %1195 = vmatpush1.msra.mxu0 0.0
  %1196 = vmatprep.mubr.f32.mxu0 0.0
  %1197 = vmatmul.mubr.f32.gmra.mrb[0].mxu0 %v173
  %v1198 = vpop.f32.mrb[0].mxu0
  %v1199 = vadd.f32 %v1130, %v1198
  %v1200 = vpop.f32.mrb[0].mxu0
  %1201 = vdwg.mxu0
  %v1202 = vadd.f32 %v1103, %v1199
  %v1203 = vxor.u32 %v1202, 2147483648
  %v1204 = vmul.f32 %v1203, 1.442695
  %v1205 = vpow.pop %v1204
  %v1206 = vadd.f32 %v1205, 1.0
  %v1207 = vrcp.pop %v1206
  %v1208 = vmul.f32 1.0, %v1207
  %1210 = vrot.lane.b32.xlu0 %v1199, 64
  %v1211 = vpop.permute.xlu0 %1210
  %v1213 = vmul.f32 %v1208, %v1211
  %1215 = vrot.lane.b32.xlu0 %v1213, 64
  %v1216 = vpop.permute.xlu0 %1215
  %v1218 = vadd.f32 %v1103, %v1216
  %v1219 = vtanh.pop %v1218
  %v1220 = vsub.f32 1.0, %v1208
  %1222 = vrot.lane.b32.xlu0 %v1219, 96
  %v1223 = vpop.permute.xlu0 %1222
  %v1225 = vmul.f32 %v1220, %v1223
  %v1226 = vmul.f32 %v1208, 0.0
  %v1227 = vadd.f32 %v1225, %v1226
  %1229 = vrot.lane.b32.xlu0 %v1227, 96
  %v1230 = vpop.permute.xlu0 %1229
  %v1231 = vsel %vm171, %v1230, 0
  %1233 = vmatprep.subr.mxu0 0.0
  %1234 = vmatpush1.msra.mxu0 %v1121
  %1235 = vmatprep.subr.mxu0 0.0
  %1236 = vmatpush1.msra.mxu0 %v1122
  %1237 = vmatprep.subr.mxu0 0.0
  %1238 = vmatpush1.msra.mxu0 %v1123
  %1239 = vmatprep.subr.mxu0 0.0
  %1240 = vmatpush1.msra.mxu0 %v1124
  %1241 = vmatprep.subr.mxu0 0.0
  %1242 = vmatpush1.msra.mxu0 0.0
  %1243 = vmatprep.subr.mxu0 0.0
  %1244 = vmatpush1.msra.mxu0 0.0
  %1245 = vmatprep.subr.mxu0 0.0
  %1246 = vmatpush1.msra.mxu0 0.0
  %1247 = vmatprep.subr.mxu0 0.0
  %1248 = vmatpush1.msra.mxu0 0.0
  %1249 = vmatprep.subr.mxu0 0.0
  %1250 = vmatpush1.msra.mxu0 0.0
  %1251 = vmatprep.subr.mxu0 0.0
  %1252 = vmatpush1.msra.mxu0 0.0
  %1253 = vmatprep.subr.mxu0 0.0
  %1254 = vmatpush1.msra.mxu0 0.0
  %1255 = vmatprep.subr.mxu0 0.0
  %1256 = vmatpush1.msra.mxu0 0.0
  %1257 = vmatprep.subr.mxu0 0.0
  %1258 = vmatpush1.msra.mxu0 0.0
  %1259 = vmatprep.subr.mxu0 0.0
  %1260 = vmatpush1.msra.mxu0 0.0
  %1261 = vmatprep.subr.mxu0 0.0
  %1262 = vmatpush1.msra.mxu0 0.0
  %1263 = vmatprep.subr.mxu0 0.0
  %1264 = vmatpush1.msra.mxu0 0.0
  %1265 = vmatprep.subr.mxu0 0.0
  %1266 = vmatpush1.msra.mxu0 0.0
  %1267 = vmatprep.subr.mxu0 0.0
  %1268 = vmatpush1.msra.mxu0 0.0
  %1269 = vmatprep.subr.mxu0 0.0
  %1270 = vmatpush1.msra.mxu0 0.0
  %1271 = vmatprep.subr.mxu0 0.0
  %1272 = vmatpush1.msra.mxu0 0.0
  %1273 = vmatprep.subr.mxu0 0.0
  %1274 = vmatpush1.msra.mxu0 0.0
  %1275 = vmatprep.subr.mxu0 0.0
  %1276 = vmatpush1.msra.mxu0 0.0
  %1277 = vmatprep.subr.mxu0 0.0
  %1278 = vmatpush1.msra.mxu0 0.0
  %1279 = vmatprep.subr.mxu0 0.0
  %1280 = vmatpush1.msra.mxu0 0.0
  %1281 = vmatprep.subr.mxu0 0.0
  %1282 = vmatpush1.msra.mxu0 0.0
  %1283 = vmatprep.subr.mxu0 0.0
  %1284 = vmatpush1.msra.mxu0 0.0
  %1285 = vmatprep.subr.mxu0 0.0
  %1286 = vmatpush1.msra.mxu0 0.0
  %1287 = vmatprep.subr.mxu0 0.0
  %1288 = vmatpush1.msra.mxu0 0.0
  %1289 = vmatprep.subr.mxu0 0.0
  %1290 = vmatpush1.msra.mxu0 0.0
  %1291 = vmatprep.subr.mxu0 0.0
  %1292 = vmatpush1.msra.mxu0 0.0
  %1293 = vmatprep.subr.mxu0 0.0
  %1294 = vmatpush1.msra.mxu0 0.0
  %1295 = vmatprep.subr.mxu0 0.0
  %1296 = vmatpush1.msra.mxu0 0.0
  %1297 = vmatprep.mubr.f32.mxu0 0.0
  %1298 = vmatmul.mubr.f32.gmra.mrb[0].mxu0 %v1231
  %v1299 = vpop.f32.mrb[0].mxu0
  %v1300 = vadd.f32 %v1130, %v1299
  %v1301 = vpop.f32.mrb[0].mxu0
  %1302 = vdwg.mxu0
  %v1304 = vrot.slane %v1300, 4
  %v1306 = vadd.f32 %v1103, %v1304
  %v1307 = vxor.u32 %v1306, 2147483648
  %v1308 = vmul.f32 %v1307, 1.442695
  %v1309 = vpow.pop %v1308
  %v1310 = vadd.f32 %v1309, 1.0
  %v1311 = vrcp.pop %v1310
  %v1312 = vmul.f32 1.0, %v1311
  %1313 = vrot.lane.b32.xlu0 %v1304, 64
  %v1314 = vpop.permute.xlu0 %1313
  %v1316 = vmul.f32 %v1312, %v1314
  %1318 = vrot.lane.b32.xlu0 %v1316, 64
  %v1319 = vpop.permute.xlu0 %1318
  %v1321 = vadd.f32 %v1103, %v1319
  %v1322 = vtanh.pop %v1321
  %v1323 = vsub.f32 1.0, %v1312
  %1325 = vrot.lane.b32.xlu0 %v1322, 96
  %v1326 = vpop.permute.xlu0 %1325
  %v1328 = vmul.f32 %v1323, %v1326
  %v1329 = vrot.slane %v1227, 4
  %v1331 = vmul.f32 %v1312, %v1329
  %v1332 = vadd.f32 %v1328, %v1331
  %v1334 = vrot.slane %v1332, 4
  %1335 = vrot.lane.b32.xlu0 %v1334, 96
  %v1336 = vpop.permute.xlu0 %1335
  %v1337 = vsel %vm171, %v1336, 0
  %1339 = vmatprep.subr.mxu0 0.0
  %1340 = vmatpush1.msra.mxu0 %v1121
  %1341 = vmatprep.subr.mxu0 0.0
  %1342 = vmatpush1.msra.mxu0 %v1122
  %1343 = vmatprep.subr.mxu0 0.0
  %1344 = vmatpush1.msra.mxu0 %v1123
  %1345 = vmatprep.subr.mxu0 0.0
  %1346 = vmatpush1.msra.mxu0 %v1124
  %1347 = vmatprep.subr.mxu0 0.0
  %1348 = vmatpush1.msra.mxu0 0.0
  %1349 = vmatprep.subr.mxu0 0.0
  %1350 = vmatpush1.msra.mxu0 0.0
  %1351 = vmatprep.subr.mxu0 0.0
  %1352 = vmatpush1.msra.mxu0 0.0
  %1353 = vmatprep.subr.mxu0 0.0
  %1354 = vmatpush1.msra.mxu0 0.0
  %1355 = vmatprep.subr.mxu0 0.0
  %1356 = vmatpush1.msra.mxu0 0.0
  %1357 = vmatprep.subr.mxu0 0.0
  %1358 = vmatpush1.msra.mxu0 0.0
  %1359 = vmatprep.subr.mxu0 0.0
  %1360 = vmatpush1.msra.mxu0 0.0
  %1361 = vmatprep.subr.mxu0 0.0
  %1362 = vmatpush1.msra.mxu0 0.0
  %1363 = vmatprep.subr.mxu0 0.0
  %1364 = vmatpush1.msra.mxu0 0.0
  %1365 = vmatprep.subr.mxu0 0.0
  %1366 = vmatpush1.msra.mxu0 0.0
  %1367 = vmatprep.subr.mxu0 0.0
  %1368 = vmatpush1.msra.mxu0 0.0
  %1369 = vmatprep.subr.mxu0 0.0
  %1370 = vmatpush1.msra.mxu0 0.0
  %1371 = vmatprep.subr.mxu0 0.0
  %1372 = vmatpush1.msra.mxu0 0.0
  %1373 = vmatprep.subr.mxu0 0.0
  %1374 = vmatpush1.msra.mxu0 0.0
  %1375 = vmatprep.subr.mxu0 0.0
  %1376 = vmatpush1.msra.mxu0 0.0
  %1377 = vmatprep.subr.mxu0 0.0
  %1378 = vmatpush1.msra.mxu0 0.0
  %1379 = vmatprep.subr.mxu0 0.0
  %1380 = vmatpush1.msra.mxu0 0.0
  %1381 = vmatprep.subr.mxu0 0.0
  %1382 = vmatpush1.msra.mxu0 0.0
  %1383 = vmatprep.subr.mxu0 0.0
  %1384 = vmatpush1.msra.mxu0 0.0
  %1385 = vmatprep.subr.mxu0 0.0
  %1386 = vmatpush1.msra.mxu0 0.0
  %1387 = vmatprep.subr.mxu0 0.0
  %1388 = vmatpush1.msra.mxu0 0.0
  %1389 = vmatprep.subr.mxu0 0.0
  %1390 = vmatpush1.msra.mxu0 0.0
  %1391 = vmatprep.subr.mxu0 0.0
  %1392 = vmatpush1.msra.mxu0 0.0
  %1393 = vmatprep.subr.mxu0 0.0
  %1394 = vmatpush1.msra.mxu0 0.0
  %1395 = vmatprep.subr.mxu0 0.0
  %1396 = vmatpush1.msra.mxu0 0.0
  %1397 = vmatprep.subr.mxu0 0.0
  %1398 = vmatpush1.msra.mxu0 0.0
  %1399 = vmatprep.subr.mxu0 0.0
  %1400 = vmatpush1.msra.mxu0 0.0
  %1401 = vmatprep.subr.mxu0 0.0
  %1402 = vmatpush1.msra.mxu0 0.0
  %1403 = vmatprep.mubr.f32.mxu0 0.0
  %1404 = vmatmul.mubr.f32.gmra.mrb[0].mxu0 %v1337
  %v1405 = vpop.f32.mrb[0].mxu0
  %v1406 = vadd.f32 %v1130, %v1405
  %v1407 = vpop.f32.mrb[0].mxu0
  %1408 = vdwg.mxu0
  %v1409 = vadd.f32 %v1108, %v1406
  %v1410 = vxor.u32 %v1409, 2147483648
  %v1411 = vmul.f32 %v1410, 1.442695
  %v1412 = vpow.pop %v1411
  %v1413 = vadd.f32 %v1412, 1.0
  %v1414 = vrcp.pop %v1413
  %v1415 = vmul.f32 1.0, %v1414
  %1417 = vrot.lane.b32.xlu0 %v1406, 64
  %v1418 = vpop.permute.xlu0 %1417
  %v1420 = vmul.f32 %v1415, %v1418
  %1422 = vrot.lane.b32.xlu0 %v1420, 64
  %v1423 = vpop.permute.xlu0 %1422
  %v1425 = vadd.f32 %v1108, %v1423
  %v1426 = vtanh.pop %v1425
  %v1427 = vsub.f32 1.0, %v1415
  %1429 = vrot.lane.b32.xlu0 %v1426, 96
  %v1430 = vpop.permute.xlu0 %1429
  %v1432 = vmul.f32 %v1427, %v1430
  %v1434 = vmul.f32 %v1415, %v1334
  %v1435 = vadd.f32 %v1432, %v1434
  %1437 = vrot.lane.b32.xlu0 %v1435, 96
  %v1438 = vpop.permute.xlu0 %1437
  %v1439 = vsel %vm171, %v1438, 0
  %1441 = vmatprep.subr.mxu0 0.0
  %1442 = vmatpush1.msra.mxu0 %v1121
  %1443 = vmatprep.subr.mxu0 0.0
  %1444 = vmatpush1.msra.mxu0 %v1122
  %1445 = vmatprep.subr.mxu0 0.0
  %1446 = vmatpush1.msra.mxu0 %v1123
  %1447 = vmatprep.subr.mxu0 0.0
  %1448 = vmatpush1.msra.mxu0 %v1124
  %1449 = vmatprep.subr.mxu0 0.0
  %1450 = vmatpush1.msra.mxu0 0.0
  %1451 = vmatprep.subr.mxu0 0.0
  %1452 = vmatpush1.msra.mxu0 0.0
  %1453 = vmatprep.subr.mxu0 0.0
  %1454 = vmatpush1.msra.mxu0 0.0
  %1455 = vmatprep.subr.mxu0 0.0
  %1456 = vmatpush1.msra.mxu0 0.0
  %1457 = vmatprep.subr.mxu0 0.0
  %1458 = vmatpush1.msra.mxu0 0.0
  %1459 = vmatprep.subr.mxu0 0.0
  %1460 = vmatpush1.msra.mxu0 0.0
  %1461 = vmatprep.subr.mxu0 0.0
  %1462 = vmatpush1.msra.mxu0 0.0
  %1463 = vmatprep.subr.mxu0 0.0
  %1464 = vmatpush1.msra.mxu0 0.0
  %1465 = vmatprep.subr.mxu0 0.0
  %1466 = vmatpush1.msra.mxu0 0.0
  %1467 = vmatprep.subr.mxu0 0.0
  %1468 = vmatpush1.msra.mxu0 0.0
  %1469 = vmatprep.subr.mxu0 0.0
  %1470 = vmatpush1.msra.mxu0 0.0
  %1471 = vmatprep.subr.mxu0 0.0
  %1472 = vmatpush1.msra.mxu0 0.0
  %1473 = vmatprep.subr.mxu0 0.0
  %1474 = vmatpush1.msra.mxu0 0.0
  %1475 = vmatprep.subr.mxu0 0.0
  %1476 = vmatpush1.msra.mxu0 0.0
  %1477 = vmatprep.subr.mxu0 0.0
  %1478 = vmatpush1.msra.mxu0 0.0
  %1479 = vmatprep.subr.mxu0 0.0
  %1480 = vmatpush1.msra.mxu0 0.0
  %1481 = vmatprep.subr.mxu0 0.0
  %1482 = vmatpush1.msra.mxu0 0.0
  %1483 = vmatprep.subr.mxu0 0.0
  %1484 = vmatpush1.msra.mxu0 0.0
  %1485 = vmatprep.subr.mxu0 0.0
  %1486 = vmatpush1.msra.mxu0 0.0
  %1487 = vmatprep.subr.mxu0 0.0
  %1488 = vmatpush1.msra.mxu0 0.0
  %1489 = vmatprep.subr.mxu0 0.0
  %1490 = vmatpush1.msra.mxu0 0.0
  %1491 = vmatprep.subr.mxu0 0.0
  %1492 = vmatpush1.msra.mxu0 0.0
  %1493 = vmatprep.subr.mxu0 0.0
  %1494 = vmatpush1.msra.mxu0 0.0
  %1495 = vmatprep.subr.mxu0 0.0
  %1496 = vmatpush1.msra.mxu0 0.0
  %1497 = vmatprep.subr.mxu0 0.0
  %1498 = vmatpush1.msra.mxu0 0.0
  %1499 = vmatprep.subr.mxu0 0.0
  %1500 = vmatpush1.msra.mxu0 0.0
  %1501 = vmatprep.subr.mxu0 0.0
  %1502 = vmatpush1.msra.mxu0 0.0
  %1503 = vmatprep.subr.mxu0 0.0
  %1504 = vmatpush1.msra.mxu0 0.0
  %1505 = vmatprep.mubr.f32.mxu0 0.0
  %1506 = vmatmul.mubr.f32.gmra.mrb[0].mxu0 %v1439
  %v1507 = vpop.f32.mrb[0].mxu0
  %v1508 = vadd.f32 %v1130, %v1507
  %v1509 = vpop.f32.mrb[0].mxu0
  %1510 = vdwg.mxu0
  %v1512 = vrot.slane %v1508, 4
  %v1514 = vadd.f32 %v1108, %v1512
  %v1515 = vxor.u32 %v1514, 2147483648
  %v1516 = vmul.f32 %v1515, 1.442695
  %v1517 = vpow.pop %v1516
  %v1518 = vadd.f32 %v1517, 1.0
  %v1519 = vrcp.pop %v1518
  %v1520 = vmul.f32 1.0, %v1519
  %1521 = vrot.lane.b32.xlu0 %v1512, 64
  %v1522 = vpop.permute.xlu0 %1521
  %v1524 = vmul.f32 %v1520, %v1522
  %1526 = vrot.lane.b32.xlu0 %v1524, 64
  %v1527 = vpop.permute.xlu0 %1526
  %v1529 = vadd.f32 %v1108, %v1527
  %v1530 = vtanh.pop %v1529
  %v1531 = vsub.f32 1.0, %v1520
  %1533 = vrot.lane.b32.xlu0 %v1530, 96
  %v1534 = vpop.permute.xlu0 %1533
  %v1536 = vmul.f32 %v1531, %v1534
  %v1537 = vrot.slane %v1435, 4
  %v1539 = vmul.f32 %v1520, %v1537
  %v1540 = vadd.f32 %v1536, %v1539
  %v1542 = vrot.slane %v1540, 4
  %1543 = vrot.lane.b32.xlu0 %v1542, 96
  %v1544 = vpop.permute.xlu0 %1543
  %v1545 = vsel %vm171, %v1544, 0
  %1547 = vmatprep.subr.mxu0 0.0
  %1548 = vmatpush1.msra.mxu0 %v1121
  %1549 = vmatprep.subr.mxu0 0.0
  %1550 = vmatpush1.msra.mxu0 %v1122
  %1551 = vmatprep.subr.mxu0 0.0
  %1552 = vmatpush1.msra.mxu0 %v1123
  %1553 = vmatprep.subr.mxu0 0.0
  %1554 = vmatpush1.msra.mxu0 %v1124
  %1555 = vmatprep.subr.mxu0 0.0
  %1556 = vmatpush1.msra.mxu0 0.0
  %1557 = vmatprep.subr.mxu0 0.0
  %1558 = vmatpush1.msra.mxu0 0.0
  %1559 = vmatprep.subr.mxu0 0.0
  %1560 = vmatpush1.msra.mxu0 0.0
  %1561 = vmatprep.subr.mxu0 0.0
  %1562 = vmatpush1.msra.mxu0 0.0
  %1563 = vmatprep.subr.mxu0 0.0
  %1564 = vmatpush1.msra.mxu0 0.0
  %1565 = vmatprep.subr.mxu0 0.0
  %1566 = vmatpush1.msra.mxu0 0.0
  %1567 = vmatprep.subr.mxu0 0.0
  %1568 = vmatpush1.msra.mxu0 0.0
  %1569 = vmatprep.subr.mxu0 0.0
  %1570 = vmatpush1.msra.mxu0 0.0
  %1571 = vmatprep.subr.mxu0 0.0
  %1572 = vmatpush1.msra.mxu0 0.0
  %1573 = vmatprep.subr.mxu0 0.0
  %1574 = vmatpush1.msra.mxu0 0.0
  %1575 = vmatprep.subr.mxu0 0.0
  %1576 = vmatpush1.msra.mxu0 0.0
  %1577 = vmatprep.subr.mxu0 0.0
  %1578 = vmatpush1.msra.mxu0 0.0
  %1579 = vmatprep.subr.mxu0 0.0
  %1580 = vmatpush1.msra.mxu0 0.0
  %1581 = vmatprep.subr.mxu0 0.0
  %1582 = vmatpush1.msra.mxu0 0.0
  %1583 = vmatprep.subr.mxu0 0.0
  %1584 = vmatpush1.msra.mxu0 0.0
  %1585 = vmatprep.subr.mxu0 0.0
  %1586 = vmatpush1.msra.mxu0 0.0
  %1587 = vmatprep.subr.mxu0 0.0
  %1588 = vmatpush1.msra.mxu0 0.0
  %1589 = vmatprep.subr.mxu0 0.0
  %1590 = vmatpush1.msra.mxu0 0.0
  %1591 = vmatprep.subr.mxu0 0.0
  %1592 = vmatpush1.msra.mxu0 0.0
  %1593 = vmatprep.subr.mxu0 0.0
  %1594 = vmatpush1.msra.mxu0 0.0
  %1595 = vmatprep.subr.mxu0 0.0
  %1596 = vmatpush1.msra.mxu0 0.0
  %1597 = vmatprep.subr.mxu0 0.0
  %1598 = vmatpush1.msra.mxu0 0.0
  %1599 = vmatprep.subr.mxu0 0.0
  %1600 = vmatpush1.msra.mxu0 0.0
  %1601 = vmatprep.subr.mxu0 0.0
  %1602 = vmatpush1.msra.mxu0 0.0
  %1603 = vmatprep.subr.mxu0 0.0
  %1604 = vmatpush1.msra.mxu0 0.0
  %1605 = vmatprep.subr.mxu0 0.0
  %1606 = vmatpush1.msra.mxu0 0.0
  %1607 = vmatprep.subr.mxu0 0.0
  %1608 = vmatpush1.msra.mxu0 0.0
  %1609 = vmatprep.subr.mxu0 0.0
  %1610 = vmatpush1.msra.mxu0 0.0
  %1611 = vmatprep.mubr.f32.mxu0 0.0
  %1612 = vmatmul.mubr.f32.gmra.mrb[0].mxu0 %v1545
  %v1613 = vpop.f32.mrb[0].mxu0
  %v1614 = vadd.f32 %v1130, %v1613
  %v1615 = vpop.f32.mrb[0].mxu0
  %1616 = vdwg.mxu0
  %v1617 = vadd.f32 %v1113, %v1614
  %v1618 = vxor.u32 %v1617, 2147483648
  %v1619 = vmul.f32 %v1618, 1.442695
  %v1620 = vpow.pop %v1619
  %v1621 = vadd.f32 %v1620, 1.0
  %v1622 = vrcp.pop %v1621
  %v1623 = vmul.f32 1.0, %v1622
  %1625 = vrot.lane.b32.xlu0 %v1614, 64
  %v1626 = vpop.permute.xlu0 %1625
  %v1628 = vmul.f32 %v1623, %v1626
  %1630 = vrot.lane.b32.xlu0 %v1628, 64
  %v1631 = vpop.permute.xlu0 %1630
  %v1633 = vadd.f32 %v1113, %v1631
  %v1634 = vtanh.pop %v1633
  %v1635 = vsub.f32 1.0, %v1623
  %1637 = vrot.lane.b32.xlu0 %v1634, 96
  %v1638 = vpop.permute.xlu0 %1637
  %v1640 = vmul.f32 %v1635, %v1638
  %v1642 = vmul.f32 %v1623, %v1542
  %v1643 = vadd.f32 %v1640, %v1642
  %1645 = vrot.lane.b32.xlu0 %v1643, 96
  %v1646 = vpop.permute.xlu0 %1645
  %v1647 = vsel %vm171, %v1646, 0
  %1649 = vmatprep.subr.mxu0 0.0
  %1650 = vmatpush1.msra.mxu0 %v1121
  %1651 = vmatprep.subr.mxu0 0.0
  %1652 = vmatpush1.msra.mxu0 %v1122
  %1653 = vmatprep.subr.mxu0 0.0
  %1654 = vmatpush1.msra.mxu0 %v1123
  %1655 = vmatprep.subr.mxu0 0.0
  %1656 = vmatpush1.msra.mxu0 %v1124
  %1657 = vmatprep.subr.mxu0 0.0
  %1658 = vmatpush1.msra.mxu0 0.0
  %1659 = vmatprep.subr.mxu0 0.0
  %1660 = vmatpush1.msra.mxu0 0.0
  %1661 = vmatprep.subr.mxu0 0.0
  %1662 = vmatpush1.msra.mxu0 0.0
  %1663 = vmatprep.subr.mxu0 0.0
  %1664 = vmatpush1.msra.mxu0 0.0
  %1665 = vmatprep.subr.mxu0 0.0
  %1666 = vmatpush1.msra.mxu0 0.0
  %1667 = vmatprep.subr.mxu0 0.0
  %1668 = vmatpush1.msra.mxu0 0.0
  %1669 = vmatprep.subr.mxu0 0.0
  %1670 = vmatpush1.msra.mxu0 0.0
  %1671 = vmatprep.subr.mxu0 0.0
  %1672 = vmatpush1.msra.mxu0 0.0
  %1673 = vmatprep.subr.mxu0 0.0
  %1674 = vmatpush1.msra.mxu0 0.0
  %1675 = vmatprep.subr.mxu0 0.0
  %1676 = vmatpush1.msra.mxu0 0.0
  %1677 = vmatprep.subr.mxu0 0.0
  %1678 = vmatpush1.msra.mxu0 0.0
  %1679 = vmatprep.subr.mxu0 0.0
  %1680 = vmatpush1.msra.mxu0 0.0
  %1681 = vmatprep.subr.mxu0 0.0
  %1682 = vmatpush1.msra.mxu0 0.0
  %1683 = vmatprep.subr.mxu0 0.0
  %1684 = vmatpush1.msra.mxu0 0.0
  %1685 = vmatprep.subr.mxu0 0.0
  %1686 = vmatpush1.msra.mxu0 0.0
  %1687 = vmatprep.subr.mxu0 0.0
  %1688 = vmatpush1.msra.mxu0 0.0
  %1689 = vmatprep.subr.mxu0 0.0
  %1690 = vmatpush1.msra.mxu0 0.0
  %1691 = vmatprep.subr.mxu0 0.0
  %1692 = vmatpush1.msra.mxu0 0.0
  %1693 = vmatprep.subr.mxu0 0.0
  %1694 = vmatpush1.msra.mxu0 0.0
  %1695 = vmatprep.subr.mxu0 0.0
  %1696 = vmatpush1.msra.mxu0 0.0
  %1697 = vmatprep.subr.mxu0 0.0
  %1698 = vmatpush1.msra.mxu0 0.0
  %1699 = vmatprep.subr.mxu0 0.0
  %1700 = vmatpush1.msra.mxu0 0.0
  %1701 = vmatprep.subr.mxu0 0.0
  %1702 = vmatpush1.msra.mxu0 0.0
  %1703 = vmatprep.subr.mxu0 0.0
  %1704 = vmatpush1.msra.mxu0 0.0
  %1705 = vmatprep.subr.mxu0 0.0
  %1706 = vmatpush1.msra.mxu0 0.0
  %1707 = vmatprep.subr.mxu0 0.0
  %1708 = vmatpush1.msra.mxu0 0.0
  %1709 = vmatprep.subr.mxu0 0.0
  %1710 = vmatpush1.msra.mxu0 0.0
  %1711 = vmatprep.subr.mxu0 0.0
  %1712 = vmatpush1.msra.mxu0 0.0
  %1713 = vmatprep.mubr.f32.mxu0 0.0
  %1714 = vmatmul.mubr.f32.gmra.mrb[0].mxu0 %v1647
  %v1715 = vpop.f32.mrb[0].mxu0
  %v1716 = vadd.f32 %v1130, %v1715
  %v1717 = vpop.f32.mrb[0].mxu0
  %1718 = vdwg.mxu0
  %v1720 = vrot.slane %v1716, 4
  %v1722 = vadd.f32 %v1113, %v1720
  %v1723 = vxor.u32 %v1722, 2147483648
  %v1724 = vmul.f32 %v1723, 1.442695
  %v1725 = vpow.pop %v1724
  %v1726 = vadd.f32 %v1725, 1.0
  %v1727 = vrcp.pop %v1726
  %v1728 = vmul.f32 1.0, %v1727
  %1729 = vrot.lane.b32.xlu0 %v1720, 64
  %v1730 = vpop.permute.xlu0 %1729
  %v1732 = vmul.f32 %v1728, %v1730
  %1734 = vrot.lane.b32.xlu0 %v1732, 64
  %v1735 = vpop.permute.xlu0 %1734
  %v1737 = vadd.f32 %v1113, %v1735
  %v1738 = vtanh.pop %v1737
  %v1739 = vsub.f32 1.0, %v1728
  %1741 = vrot.lane.b32.xlu0 %v1738, 96
  %v1742 = vpop.permute.xlu0 %1741
  %v1744 = vmul.f32 %v1739, %v1742
  %v1745 = vrot.slane %v1643, 4
  %v1747 = vmul.f32 %v1728, %v1745
  %v1748 = vadd.f32 %v1744, %v1747
  %v1750 = vrot.slane %v1748, 4
  %1751 = vrot.lane.b32.xlu0 %v1750, 96
  %v1752 = vpop.permute.xlu0 %1751
  %v1753 = vsel %vm171, %v1752, 0
  %1755 = vmatprep.subr.mxu0 0.0
  %1756 = vmatpush1.msra.mxu0 %v1121
  %1757 = vmatprep.subr.mxu0 0.0
  %1758 = vmatpush1.msra.mxu0 %v1122
  %1759 = vmatprep.subr.mxu0 0.0
  %1760 = vmatpush1.msra.mxu0 %v1123
  %1761 = vmatprep.subr.mxu0 0.0
  %1762 = vmatpush1.msra.mxu0 %v1124
  %1763 = vmatprep.subr.mxu0 0.0
  %1764 = vmatpush1.msra.mxu0 0.0
  %1765 = vmatprep.subr.mxu0 0.0
  %1766 = vmatpush1.msra.mxu0 0.0
  %1767 = vmatprep.subr.mxu0 0.0
  %1768 = vmatpush1.msra.mxu0 0.0
  %1769 = vmatprep.subr.mxu0 0.0
  %1770 = vmatpush1.msra.mxu0 0.0
  %1771 = vmatprep.subr.mxu0 0.0
  %1772 = vmatpush1.msra.mxu0 0.0
  %1773 = vmatprep.subr.mxu0 0.0
  %1774 = vmatpush1.msra.mxu0 0.0
  %1775 = vmatprep.subr.mxu0 0.0
  %1776 = vmatpush1.msra.mxu0 0.0
  %1777 = vmatprep.subr.mxu0 0.0
  %1778 = vmatpush1.msra.mxu0 0.0
  %1779 = vmatprep.subr.mxu0 0.0
  %1780 = vmatpush1.msra.mxu0 0.0
  %1781 = vmatprep.subr.mxu0 0.0
  %1782 = vmatpush1.msra.mxu0 0.0
  %1783 = vmatprep.subr.mxu0 0.0
  %1784 = vmatpush1.msra.mxu0 0.0
  %1785 = vmatprep.subr.mxu0 0.0
  %1786 = vmatpush1.msra.mxu0 0.0
  %1787 = vmatprep.subr.mxu0 0.0
  %1788 = vmatpush1.msra.mxu0 0.0
  %1789 = vmatprep.subr.mxu0 0.0
  %1790 = vmatpush1.msra.mxu0 0.0
  %1791 = vmatprep.subr.mxu0 0.0
  %1792 = vmatpush1.msra.mxu0 0.0
  %1793 = vmatprep.subr.mxu0 0.0
  %1794 = vmatpush1.msra.mxu0 0.0
  %1795 = vmatprep.subr.mxu0 0.0
  %1796 = vmatpush1.msra.mxu0 0.0
  %1797 = vmatprep.subr.mxu0 0.0
  %1798 = vmatpush1.msra.mxu0 0.0
  %1799 = vmatprep.subr.mxu0 0.0
  %1800 = vmatpush1.msra.mxu0 0.0
  %1801 = vmatprep.subr.mxu0 0.0
  %1802 = vmatpush1.msra.mxu0 0.0
  %1803 = vmatprep.subr.mxu0 0.0
  %1804 = vmatpush1.msra.mxu0 0.0
  %1805 = vmatprep.subr.mxu0 0.0
  %1806 = vmatpush1.msra.mxu0 0.0
  %1807 = vmatprep.subr.mxu0 0.0
  %1808 = vmatpush1.msra.mxu0 0.0
  %1809 = vmatprep.subr.mxu0 0.0
  %1810 = vmatpush1.msra.mxu0 0.0
  %1811 = vmatprep.subr.mxu0 0.0
  %1812 = vmatpush1.msra.mxu0 0.0
  %1813 = vmatprep.subr.mxu0 0.0
  %1814 = vmatpush1.msra.mxu0 0.0
  %1815 = vmatprep.subr.mxu0 0.0
  %1816 = vmatpush1.msra.mxu0 0.0
  %1817 = vmatprep.subr.mxu0 0.0
  %1818 = vmatpush1.msra.mxu0 0.0
  %1819 = vmatprep.mubr.f32.mxu0 0.0
  %1820 = vmatmul.mubr.f32.gmra.mrb[0].mxu0 %v1753
  %v1821 = vpop.f32.mrb[0].mxu0
  %v1822 = vadd.f32 %v1130, %v1821
  %v1823 = vpop.f32.mrb[0].mxu0
  %1824 = vdwg.mxu0
  %v1825 = vadd.f32 %v1118, %v1822
  %v1826 = vxor.u32 %v1825, 2147483648
  %v1827 = vmul.f32 %v1826, 1.442695
  %v1828 = vpow.pop %v1827
  %v1829 = vadd.f32 %v1828, 1.0
  %v1830 = vrcp.pop %v1829
  %v1831 = vmul.f32 1.0, %v1830
  %1833 = vrot.lane.b32.xlu0 %v1822, 64
  %v1834 = vpop.permute.xlu0 %1833
  %v1836 = vmul.f32 %v1831, %v1834
  %1838 = vrot.lane.b32.xlu0 %v1836, 64
  %v1839 = vpop.permute.xlu0 %1838
  %v1841 = vadd.f32 %v1118, %v1839
  %v1842 = vtanh.pop %v1841
  %v1843 = vsub.f32 1.0, %v1831
  %1845 = vrot.lane.b32.xlu0 %v1842, 96
  %v1846 = vpop.permute.xlu0 %1845
  %v1848 = vmul.f32 %v1843, %v1846
  %v1850 = vmul.f32 %v1831, %v1750
  %v1851 = vadd.f32 %v1848, %v1850
  %1853 = vrot.lane.b32.xlu0 %v1851, 96
  %v1854 = vpop.permute.xlu0 %1853
  %v1855 = vsel %vm171, %v1854, 0
  %1857 = vmatprep.subr.mxu0 0.0
  %1858 = vmatpush1.msra.mxu0 %v1121
  %1859 = vmatprep.subr.mxu0 0.0
  %1860 = vmatpush1.msra.mxu0 %v1122
  %1861 = vmatprep.subr.mxu0 0.0
  %1862 = vmatpush1.msra.mxu0 %v1123
  %1863 = vmatprep.subr.mxu0 0.0
  %1864 = vmatpush1.msra.mxu0 %v1124
  %1865 = vmatprep.subr.mxu0 0.0
  %1866 = vmatpush1.msra.mxu0 0.0
  %1867 = vmatprep.subr.mxu0 0.0
  %1868 = vmatpush1.msra.mxu0 0.0
  %1869 = vmatprep.subr.mxu0 0.0
  %1870 = vmatpush1.msra.mxu0 0.0
  %1871 = vmatprep.subr.mxu0 0.0
  %1872 = vmatpush1.msra.mxu0 0.0
  %1873 = vmatprep.subr.mxu0 0.0
  %1874 = vmatpush1.msra.mxu0 0.0
  %1875 = vmatprep.subr.mxu0 0.0
  %1876 = vmatpush1.msra.mxu0 0.0
  %1877 = vmatprep.subr.mxu0 0.0
  %1878 = vmatpush1.msra.mxu0 0.0
  %1879 = vmatprep.subr.mxu0 0.0
  %1880 = vmatpush1.msra.mxu0 0.0
  %1881 = vmatprep.subr.mxu0 0.0
  %1882 = vmatpush1.msra.mxu0 0.0
  %1883 = vmatprep.subr.mxu0 0.0
  %1884 = vmatpush1.msra.mxu0 0.0
  %1885 = vmatprep.subr.mxu0 0.0
  %1886 = vmatpush1.msra.mxu0 0.0
  %1887 = vmatprep.subr.mxu0 0.0
  %1888 = vmatpush1.msra.mxu0 0.0
  %1889 = vmatprep.subr.mxu0 0.0
  %1890 = vmatpush1.msra.mxu0 0.0
  %1891 = vmatprep.subr.mxu0 0.0
  %1892 = vmatpush1.msra.mxu0 0.0
  %1893 = vmatprep.subr.mxu0 0.0
  %1894 = vmatpush1.msra.mxu0 0.0
  %1895 = vmatprep.subr.mxu0 0.0
  %1896 = vmatpush1.msra.mxu0 0.0
  %1897 = vmatprep.subr.mxu0 0.0
  %1898 = vmatpush1.msra.mxu0 0.0
  %1899 = vmatprep.subr.mxu0 0.0
  %1900 = vmatpush1.msra.mxu0 0.0
  %1901 = vmatprep.subr.mxu0 0.0
  %1902 = vmatpush1.msra.mxu0 0.0
  %1903 = vmatprep.subr.mxu0 0.0
  %1904 = vmatpush1.msra.mxu0 0.0
  %1905 = vmatprep.subr.mxu0 0.0
  %1906 = vmatpush1.msra.mxu0 0.0
  %1907 = vmatprep.subr.mxu0 0.0
  %1908 = vmatpush1.msra.mxu0 0.0
  %1909 = vmatprep.subr.mxu0 0.0
  %1910 = vmatpush1.msra.mxu0 0.0
  %1911 = vmatprep.subr.mxu0 0.0
  %1912 = vmatpush1.msra.mxu0 0.0
  %1913 = vmatprep.subr.mxu0 0.0
  %1914 = vmatpush1.msra.mxu0 0.0
  %1915 = vmatprep.subr.mxu0 0.0
  %1916 = vmatpush1.msra.mxu0 0.0
  %1917 = vmatprep.subr.mxu0 0.0
  %1918 = vmatpush1.msra.mxu0 0.0
  %1919 = vmatprep.subr.mxu0 0.0
  %1920 = vmatpush1.msra.mxu0 0.0
  %1921 = vmatprep.mubr.f32.mxu0 0.0
  %1922 = vmatmul.mubr.f32.gmra.mrb[0].mxu0 %v1855
  %v1923 = vpop.f32.mrb[0].mxu0
  %v1924 = vadd.f32 %v1130, %v1923
  %v1925 = vpop.f32.mrb[0].mxu0
  %1926 = vdwg.mxu0
  %v1928 = vrot.slane %v1924, 4
  %v1930 = vadd.f32 %v1118, %v1928
  %v1931 = vxor.u32 %v1930, 2147483648
  %v1932 = vmul.f32 %v1931, 1.442695
  %v1933 = vpow.pop %v1932
  %v1934 = vadd.f32 %v1933, 1.0
  %v1935 = vrcp.pop %v1934
  %v1936 = vmul.f32 1.0, %v1935
  %1937 = vrot.lane.b32.xlu0 %v1928, 64
  %v1938 = vpop.permute.xlu0 %1937
  %v1940 = vmul.f32 %v1936, %v1938
  %1942 = vrot.lane.b32.xlu0 %v1940, 64
  %v1943 = vpop.permute.xlu0 %1942
  %v1945 = vadd.f32 %v1118, %v1943
  %v1946 = vtanh.pop %v1945
  %v1947 = vsub.f32 1.0, %v1936
  %1949 = vrot.lane.b32.xlu0 %v1946, 96
  %v1950 = vpop.permute.xlu0 %1949
  %v1952 = vmul.f32 %v1947, %v1950
  %v1953 = vrot.slane %v1851, 4
  %v1955 = vmul.f32 %v1936, %v1953
  %v1956 = vadd.f32 %v1952, %v1955
  %v1957 = vsel %vm1000, %v1227, %v1332
  %v1958 = vsel %vm1000, %v1435, %v1540
  %v1959 = vsel %vm1000, %v1643, %v1748
  %v1960 = vsel %vm1000, %v1851, %v1956
  %v1961 = vld [vmem:[%s9] sm:$0xff]
  %v1962 = vld [vmem:[%s9 + $0x8] sm:$0xff]
  %v1963 = vld [vmem:[%s9 + $0x10] sm:$0xff]
  %v1964 = vld [vmem:[%s9 + $0x18] sm:$0xff]
  %v1965 = vld [vmem:[%s10] sm:$0x1]
  %v1967 = vlaneseq
  %v1968 = vshrl.u32 %v1967, 7
  %v1969 = vsub.s32 0, %v1968
  %v1970 = vrot.slane %v1965, %v1969
  %1976 = vrot.lane.b32.xlu0 %v1957, 96
  %v1977 = vpop.permute.xlu0 %1976
  %1978 = vrot.lane.b32.xlu0 %v1958, 96
  %v1979 = vpop.permute.xlu0 %1978
  %1980 = vrot.lane.b32.xlu0 %v1959, 96
  %v1981 = vpop.permute.xlu0 %1980
  %1982 = vrot.lane.b32.xlu0 %v1960, 96
  %v1983 = vpop.permute.xlu0 %1982
  %v1984 = vsel %vm171, %v1977, 0
  %v1986 = vsel %vm171, %v1979, 0
  %v1988 = vsel %vm171, %v1981, 0
  %v1990 = vsel %vm171, %v1983, 0
  %1992 = vmatprep.subr.mxu0 0.0
  %1993 = vmatpush1.msra.mxu0 %v1961
  %1994 = vmatprep.subr.mxu0 0.0
  %1995 = vmatpush1.msra.mxu0 %v1962
  %1996 = vmatprep.subr.mxu0 0.0
  %1997 = vmatpush1.msra.mxu0 %v1963
  %1998 = vmatprep.subr.mxu0 0.0
  %1999 = vmatpush1.msra.mxu0 %v1964
  %2000 = vmatprep.subr.mxu0 0.0
  %2001 = vmatpush1.msra.mxu0 0.0
  %2002 = vmatprep.subr.mxu0 0.0
  %2003 = vmatpush1.msra.mxu0 0.0
  %2004 = vmatprep.subr.mxu0 0.0
  %2005 = vmatpush1.msra.mxu0 0.0
  %2006 = vmatprep.subr.mxu0 0.0
  %2007 = vmatpush1.msra.mxu0 0.0
  %2008 = vmatprep.subr.mxu0 0.0
  %2009 = vmatpush1.msra.mxu0 0.0
  %2010 = vmatprep.subr.mxu0 0.0
  %2011 = vmatpush1.msra.mxu0 0.0
  %2012 = vmatprep.subr.mxu0 0.0
  %2013 = vmatpush1.msra.mxu0 0.0
  %2014 = vmatprep.subr.mxu0 0.0
  %2015 = vmatpush1.msra.mxu0 0.0
  %2016 = vmatprep.subr.mxu0 0.0
  %2017 = vmatpush1.msra.mxu0 0.0
  %2018 = vmatprep.subr.mxu0 0.0
  %2019 = vmatpush1.msra.mxu0 0.0
  %2020 = vmatprep.subr.mxu0 0.0
  %2021 = vmatpush1.msra.mxu0 0.0
  %2022 = vmatprep.subr.mxu0 0.0
  %2023 = vmatpush1.msra.mxu0 0.0
  %2024 = vmatprep.subr.mxu0 0.0
  %2025 = vmatpush1.msra.mxu0 0.0
  %2026 = vmatprep.subr.mxu0 0.0
  %2027 = vmatpush1.msra.mxu0 0.0
  %2028 = vmatprep.subr.mxu0 0.0
  %2029 = vmatpush1.msra.mxu0 0.0
  %2030 = vmatprep.subr.mxu0 0.0
  %2031 = vmatpush1.msra.mxu0 0.0
  %2032 = vmatprep.subr.mxu0 0.0
  %2033 = vmatpush1.msra.mxu0 0.0
  %2034 = vmatprep.subr.mxu0 0.0
  %2035 = vmatpush1.msra.mxu0 0.0
  %2036 = vmatprep.subr.mxu0 0.0
  %2037 = vmatpush1.msra.mxu0 0.0
  %2038 = vmatprep.subr.mxu0 0.0
  %2039 = vmatpush1.msra.mxu0 0.0
  %2040 = vmatprep.subr.mxu0 0.0
  %2041 = vmatpush1.msra.mxu0 0.0
  %2042 = vmatprep.subr.mxu0 0.0
  %2043 = vmatpush1.msra.mxu0 0.0
  %2044 = vmatprep.subr.mxu0 0.0
  %2045 = vmatpush1.msra.mxu0 0.0
  %2046 = vmatprep.subr.mxu0 0.0
  %2047 = vmatpush1.msra.mxu0 0.0
  %2048 = vmatprep.subr.mxu0 0.0
  %2049 = vmatpush1.msra.mxu0 0.0
  %2050 = vmatprep.subr.mxu0 0.0
  %2051 = vmatpush1.msra.mxu0 0.0
  %2052 = vmatprep.subr.mxu0 0.0
  %2053 = vmatpush1.msra.mxu0 0.0
  %2054 = vmatprep.subr.mxu0 0.0
  %2055 = vmatpush1.msra.mxu0 0.0
  %2056 = vmatprep.mubr.f32.mxu0 0.0
  %2057 = vmatmul.mubr.f32.gmra.mrb[0].mxu0 %v1984
  %v2058 = vpop.f32.mrb[0].mxu0
  %v2059 = vadd.f32 %v1970, %v2058
  %v2060 = vpop.f32.mrb[0].mxu0
  %2061 = vmatprep.mubr.f32.mxu0 0.0
  %2062 = vmatmul.mubr.f32.gmra.mrb[0].mxu0 %v1986
  %v2063 = vpop.f32.mrb[0].mxu0
  %v2064 = vadd.f32 %v1970, %v2063
  %v2065 = vpop.f32.mrb[0].mxu0
  %2066 = vmatprep.mubr.f32.mxu0 0.0
  %2067 = vmatmul.mubr.f32.gmra.mrb[0].mxu0 %v1988
  %v2068 = vpop.f32.mrb[0].mxu0
  %v2069 = vadd.f32 %v1970, %v2068
  %v2070 = vpop.f32.mrb[0].mxu0
  %2071 = vmatprep.mubr.f32.mxu0 0.0
  %2072 = vmatmul.mubr.f32.gmra.mrb[0].mxu0 %v1990
  %v2073 = vpop.f32.mrb[0].mxu0
  %v2074 = vadd.f32 %v1970, %v2073
  %v2075 = vpop.f32.mrb[0].mxu0
  %2076 = vdwg.mxu0
  %v2077 = vmax.f32 %v2059, 0.0
  %v2078 = vmax.f32 %v2064, 0.0
  %v2079 = vmax.f32 %v2069, 0.0
  %v2080 = vmax.f32 %v2074, 0.0
  %v2081 = vld [vmem:[%s11] sm:$0x1]
  %v2083 = vlaneseq
  %v2084 = vshrl.u32 %v2083, 7
  %v2085 = vsub.s32 0, %v2084
  %v2086 = vrot.slane %v2081, %v2085
  %v2088 = vmul.f32 %v2077, %v2086
  %v2089 = vmul.f32 %v2078, %v2086
  %v2090 = vmul.f32 %v2079, %v2086
  %v2091 = vmul.f32 %v2080, %v2086
  %v2092 = vsel %vm171, %v2088, 0.0
  %2093 = vadd.xlane.f32.xlu0 %v2092
  %v2094 = vpop.xlane.xlu0 %2093
  %v2095 = vsel %vm171, %v2089, 0.0
  %2096 = vadd.xlane.f32.xlu0 %v2095
  %v2097 = vpop.xlane.xlu0 %2096
  %v2098 = vsel %vm171, %v2090, 0.0
  %2099 = vadd.xlane.f32.xlu0 %v2098
  %v2100 = vpop.xlane.xlu0 %2099
  %v2101 = vsel %vm171, %v2091, 0.0
  %2102 = vadd.xlane.f32.xlu0 %v2101
  %v2103 = vpop.xlane.xlu0 %2102
  %v2104 = vld [vmem:[#allocation2] sm:$0x1]
  %v2106 = vlaneseq
  %v2107 = vshrl.u32 %v2106, 7
  %v2108 = vsub.s32 0, %v2107
  %v2109 = vrot.slane %v2104, %v2108
  %v2111 = vadd.f32 %v2094, %v2109
  %v2112 = vadd.f32 %v2097, %v2109
  %v2113 = vadd.f32 %v2100, %v2109
  %v2114 = vadd.f32 %v2103, %v2109
  %2116 = vset.pattern.permute.xlu0 0
  %2117 = vperm.xlu0 %2116, %v2111
  %v2118 = vpop.permute.xlu0 %2117
  %2121 = vset.pattern.permute.xlu0 0
  %2122 = vperm.xlu0 %2121, %v2112
  %v2123 = vpop.permute.xlu0 %2122
  %2126 = vset.pattern.permute.xlu0 0
  %2127 = vperm.xlu0 %2126, %v2113
  %v2128 = vpop.permute.xlu0 %2127
  %2131 = vset.pattern.permute.xlu0 0
  %2132 = vperm.xlu0 %2131, %v2114
  %v2133 = vpop.permute.xlu0 %2132
  %2135 = vst [vmem:[%s13] sm:$0xff] %v2118
  %2136 = vst [vmem:[%s13 + $0x8] sm:$0xff] %v2123
  %2137 = vst [vmem:[%s13 + $0x10] sm:$0xff] %v2128
  %2138 = vst [vmem:[%s13 + $0x18] sm:$0xff] %v2133
  // Predicated region
  $region54: #{gru_regressor_forward.1} parent=0 // pred_check
    _
  $region55: #{gru_regressor_forward.1} parent=0 // pred_check_branch
    %2140 = sbr.rel (0) target = $region57
  $region56: #{gru_regressor_forward.1} parent=0 // pred_region
    _
  $region57: #{gru_regressor_forward.1} parent=0 // pred_fallthru
    _
  // Predicated region
  $region58: #{gru_regressor_forward.1} parent=0 // pred_check
    _
  $region59: #{gru_regressor_forward.1} parent=0 // pred_check_branch
    %2142 = sbr.rel (0) target = $region61
  $region60: #{gru_regressor_forward.1} parent=0 // pred_region
    _
  $region61: #{gru_regressor_forward.1} parent=0 // pred_fallthru
    _

</llo_original>
